<compile_context>
chip_gen: v6e
topology: v6e:2x2x1
jax: 0.10.0
libtpu: 0.0.40
codegen_flags: <defaults>
</compile_context>

<pallas_src>
import jax
import jax.numpy as jnp
from jax import lax
from jax.experimental import pallas as pl
from jax.experimental.pallas import tpu as pltpu


def _basic_block_kernel(x_ref, w1_ref, b1_ref, w2_ref, b2_ref, out_ref):
    # x_ref block : (1, H+4, W+2, Cp) f32  (whole padded image, batch-resident)
    # w*_ref      : (3, 3*Cp, Cp)     bf16 (BN scale folded, K = kw-major, ci)
    # b*_ref      : (1, Cp)           f32  (folded BN shift)
    # out_ref     : (1, TH, W, Cp)    f32
    _, TH, W, Cp = out_ref.shape
    RH = TH + 4            # input rows per step (2-row halo per side)
    R1 = TH + 2            # conv1 output rows needed by conv2
    K3 = 3 * Cp
    M1 = R1 * W
    M2 = TH * W

    t = pl.program_id(1)
    n_t = pl.num_programs(1)

    # Slice this tile's halo window out of the resident padded image (f32).
    xw = x_ref[0, pl.ds(t * TH, RH)]                       # (RH, W+2, Cp) f32

    # ---- conv1: im2col over kw (K = 3*Cp), 3 dots over kh -------------------
    xb = xw.astype(jnp.bfloat16)
    p1 = jnp.concatenate([xb[:, 0:W], xb[:, 1:W + 1], xb[:, 2:W + 2]],
                         axis=-1)                          # (RH, W, 3*Cp) bf16
    acc1 = jnp.dot(p1[0:R1].reshape(M1, K3), w1_ref[0],
                   preferred_element_type=jnp.float32)
    for kh in (1, 2):
        acc1 = acc1 + jnp.dot(p1[kh:kh + R1].reshape(M1, K3), w1_ref[kh],
                              preferred_element_type=jnp.float32)

    # ---- bn1 shift (scale already folded into w1) + relu --------------------
    a1 = jnp.maximum(acc1 + b1_ref[...], 0.0).reshape(R1, W, Cp)

    # conv1 halo rows falling outside the image must be exactly zero so that
    # conv2 sees proper zero padding.  Row-only predicate (R1, 1, Cp).
    row = lax.broadcasted_iota(jnp.int32, (R1, 1, Cp), 0)
    keep = jnp.logical_and(jnp.logical_or(row > 0, t > 0),
                           jnp.logical_or(row < R1 - 1, t < n_t - 1))
    a1 = jnp.where(keep, a1, 0.0).astype(jnp.bfloat16)     # (R1, W, Cp) bf16

    # ---- conv2: im2col over kw with zero-column edge fill -------------------
    zc = jnp.zeros((R1, 1, Cp), jnp.bfloat16)
    p2 = jnp.concatenate([
        jnp.concatenate([zc, a1[:, :W - 1]], axis=1),      # kw = 0
        a1,                                                # kw = 1
        jnp.concatenate([a1[:, 1:], zc], axis=1),          # kw = 2
    ], axis=-1)                                            # (R1, W, 3*Cp) bf16
    acc2 = jnp.dot(p2[0:TH].reshape(M2, K3), w2_ref[0],
                   preferred_element_type=jnp.float32)
    for kh in (1, 2):
        acc2 = acc2 + jnp.dot(p2[kh:kh + TH].reshape(M2, K3), w2_ref[kh],
                              preferred_element_type=jnp.float32)

    # ---- bn2 shift + residual (exact f32 identity from the input window) ----
    ident = xw[2:2 + TH, 1:1 + W, :].reshape(M2, Cp)
    y = jnp.maximum(acc2 + b2_ref[...] + ident, 0.0)
    out_ref[0] = y.reshape(TH, W, Cp).astype(out_ref.dtype)


def basic_block_pallas(x_nchw, params, eps=1e-5, tile_h=32):
    """BasicBlock forward (stride=1, no downsample). x: (N, C, H, W) f32."""
    N, C, H, W = x_nchw.shape
    LANE = 128
    Cp = ((C + LANE - 1) // LANE) * LANE    # lane-dense channel padding
    # Largest divisor of H that is <= the requested tile_h (no tile_h=H blowup).
    tile_h = max(d for d in range(1, min(tile_h, H) + 1) if H % d == 0)
    n_t = H // tile_h

    # NCHW -> NHWC (f32), pad H by 2, W by 1, channels to Cp.  Stays f32: the
    # kernel casts matmul operands to bf16 itself and reads the identity in f32.
    x = jnp.transpose(x_nchw, (0, 2, 3, 1)).astype(jnp.float32)
    xp = jnp.pad(x, ((0, 0), (2, 2), (1, 1), (0, Cp - C)))   # (N, H+4, W+2, Cp)

    def fold_bn(g, b, m, v):
        scale = g / jnp.sqrt(v + eps)                        # (C,) f32
        shift = b - m * scale
        shift = jnp.pad(shift, (0, Cp - C)).reshape(1, Cp).astype(jnp.float32)
        return scale, shift

    s1, b1 = fold_bn(params['bn1_g'], params['bn1_b'],
                     params['bn1_m'], params['bn1_v'])
    s2, b2 = fold_bn(params['bn2_g'], params['bn2_b'],
                     params['bn2_m'], params['bn2_v'])

    def prep_w(w, scale):
        # OIHW -> (kh, kw, ci, co), fold BN scale into co, pad to Cp,
        # reshape to (3, 3*Cp, Cp) with K = kw*Cp + ci (matches the im2col).
        w = jnp.transpose(w, (2, 3, 1, 0)).astype(jnp.float32)
        w = w * scale.reshape(1, 1, 1, C)
        w = jnp.pad(w, ((0, 0), (0, 0), (0, Cp - C), (0, Cp - C)))
        return w.reshape(3, 3 * Cp, Cp).astype(jnp.bfloat16)

    w1 = prep_w(params['conv1_w'], s1)
    w2 = prep_w(params['conv2_w'], s2)

    out_nhwc = pl.pallas_call(
        _basic_block_kernel,
        out_shape=jax.ShapeDtypeStruct((N, H, W, Cp), jnp.float32),
        grid_spec=pltpu.PrefetchScalarGridSpec(
            num_scalar_prefetch=0,
            grid=(N, n_t),
            in_specs=[
                # Whole padded image per batch; index_map ignores t so the
                # block stays resident across all H-tiles of the same image.
                pl.BlockSpec((1, H + 4, W + 2, Cp), lambda n, t: (n, 0, 0, 0)),
                pl.BlockSpec((3, 3 * Cp, Cp), lambda n, t: (0, 0, 0)),   # w1
                pl.BlockSpec((1, Cp), lambda n, t: (0, 0)),              # shift1
                pl.BlockSpec((3, 3 * Cp, Cp), lambda n, t: (0, 0, 0)),   # w2
                pl.BlockSpec((1, Cp), lambda n, t: (0, 0)),              # shift2
            ],
            out_specs=pl.BlockSpec((1, tile_h, W, Cp),
                                   lambda n, t: (n, t, 0, 0)),
        ),
        compiler_params=pltpu.CompilerParams(
            dimension_semantics=("parallel", "parallel"),
            vmem_limit_bytes=48 * 1024 * 1024,   # headroom under v7x's 64 MiB
        ),
    )(xp, w1, b1, w2, b2)

    out_nhwc = out_nhwc[..., :C]                  # drop channel padding
    # NCHW interface kept for parity with the PyTorch module; drop these
    # transposes if the surrounding network can stay NHWC.
    return jnp.transpose(out_nhwc, (0, 3, 1, 2))


def basic_block_reference(x_nchw, params, eps=1e-5):
    """Pure-JAX reference matching PyTorch BasicBlock (eval-mode BN), f32."""
    def conv3x3(x, w):
        return lax.conv_general_dilated(
            x, w, window_strides=(1, 1), padding=((1, 1), (1, 1)),
            dimension_numbers=('NCHW', 'OIHW', 'NCHW'))

    def bn(x, g, b, m, v):
        g = g.reshape(1, -1, 1, 1)
        b = b.reshape(1, -1, 1, 1)
        m = m.reshape(1, -1, 1, 1)
        v = v.reshape(1, -1, 1, 1)
        return (x - m) / jnp.sqrt(v + eps) * g + b

    identity = x_nchw
    out = conv3x3(x_nchw, params['conv1_w'])
    out = bn(out, params['bn1_g'], params['bn1_b'], params['bn1_m'], params['bn1_v'])
    out = jnp.maximum(out, 0.0)
    out = conv3x3(out, params['conv2_w'])
    out = bn(out, params['bn2_g'], params['bn2_b'], params['bn2_m'], params['bn2_v'])
    out = out + identity
    return jnp.maximum(out, 0.0)


def make_params(key, planes):
    ks = jax.random.split(key, 10)
    C = planes
    return {
        'conv1_w': 0.1 * jax.random.normal(ks[0], (C, C, 3, 3), jnp.float32),
        'conv2_w': 0.1 * jax.random.normal(ks[1], (C, C, 3, 3), jnp.float32),
        'bn1_g': 1.0 + 0.1 * jax.random.normal(ks[2], (C,), jnp.float32),
        'bn1_b': 0.1 * jax.random.normal(ks[3], (C,), jnp.float32),
        'bn1_m': 0.1 * jax.random.normal(ks[4], (C,), jnp.float32),
        'bn1_v': 0.5 + jnp.abs(jax.random.normal(ks[5], (C,), jnp.float32)),
        'bn2_g': 1.0 + 0.1 * jax.random.normal(ks[6], (C,), jnp.float32),
        'bn2_b': 0.1 * jax.random.normal(ks[7], (C,), jnp.float32),
        'bn2_m': 0.1 * jax.random.normal(ks[8], (C,), jnp.float32),
        'bn2_v': 0.5 + jnp.abs(jax.random.normal(ks[9], (C,), jnp.float32)),
    }


if __name__ == "__main__":
    key = jax.random.PRNGKey(0)
    k_x, k_p = jax.random.split(key)

    N, C, H, W = 2, 4, 16, 16          # inplanes == planes, stride=1, no downsample
    x = jax.random.normal(k_x, (N, C, H, W), jnp.float32)
    params = make_params(k_p, C)

    out = basic_block_pallas(x, params, tile_h=8)   # grid = (2 batches, 2 H-tiles)
    out = jax.block_until_ready(out)

    ref = basic_block_reference(x, params)
    ref = jax.block_until_ready(ref)

    assert out.shape == (N, C, H, W)
    err = jnp.max(jnp.abs(out - ref))
    # bf16 matmul operands (activations + BN-folded weights) vs. the f32 ref.
    assert jnp.allclose(out, ref, atol=5e-2, rtol=5e-2), f"max abs err = {err}"

    print("KERNEL_OK")
</pallas_src>

<mosaic_0001>
module attributes {stable_mosaic.version = 11 : i64} {
  func.func @_basic_block_kernel(%arg0: i32, %arg1: i32, %arg2: memref<1x20x18x128xf32, #tpu.memory_space<vmem>>, %arg3: memref<3x384x128xbf16, #tpu.memory_space<vmem>>, %arg4: memref<1x128xf32, #tpu.memory_space<vmem>>, %arg5: memref<3x384x128xbf16, #tpu.memory_space<vmem>>, %arg6: memref<1x128xf32, #tpu.memory_space<vmem>>, %arg7: memref<1x8x16x128xf32, #tpu.memory_space<vmem>>) attributes {dimension_semantics = [#tpu.dimension_semantics<parallel>, #tpu.dimension_semantics<parallel>], iteration_bounds = array<i64: 2, 2>, scalar_prefetch = 0 : i64, scratch_operands = 0 : i64, tpu.core_type = #tpu.core_type<tc>, window_params = [{transform_indices = @transform_0, window_bounds = array<i64: 1, 20, 18, 128>}, {pipeline_mode = #tpu.pipeline_mode<synchronous>, transform_indices = @transform_1, window_bounds = array<i64: 3, 384, 128>}, {pipeline_mode = #tpu.pipeline_mode<synchronous>, transform_indices = @transform_2, window_bounds = array<i64: 1, 128>}, {pipeline_mode = #tpu.pipeline_mode<synchronous>, transform_indices = @transform_3, window_bounds = array<i64: 3, 384, 128>}, {pipeline_mode = #tpu.pipeline_mode<synchronous>, transform_indices = @transform_4, window_bounds = array<i64: 1, 128>}, {transform_indices = @transform_5, window_bounds = array<i64: 1, 8, 16, 128>}]} {
    %c8_i32 = arith.constant 8 : i32
    %0 = arith.muli %arg1, %c8_i32 : i32
    %c0 = arith.constant 0 : index
    %1 = arith.index_cast %0 : i32 to index
    %c0_0 = arith.constant 0 : index
    %c0_1 = arith.constant 0 : index
    %2 = vector.load %arg2[%c0, %1, %c0_0, %c0_1] : memref<1x20x18x128xf32, #tpu.memory_space<vmem>>, vector<1x12x18x128xf32>
    %3 = vector.shape_cast %2 : vector<1x12x18x128xf32> to vector<12x18x128xf32>
    %4 = arith.truncf %3 : vector<12x18x128xf32> to vector<12x18x128xbf16>
    %5 = vector.extract_strided_slice %4 {offsets = [0, 0, 0], sizes = [12, 16, 128], strides = [1, 1, 1]} : vector<12x18x128xbf16> to vector<12x16x128xbf16>
    %6 = vector.extract_strided_slice %4 {offsets = [0, 1, 0], sizes = [12, 16, 128], strides = [1, 1, 1]} : vector<12x18x128xbf16> to vector<12x16x128xbf16>
    %7 = vector.extract_strided_slice %4 {offsets = [0, 2, 0], sizes = [12, 16, 128], strides = [1, 1, 1]} : vector<12x18x128xbf16> to vector<12x16x128xbf16>
    %8 = tpu.concatenate %5, %6, %7 in 2 : vector<12x16x128xbf16>, vector<12x16x128xbf16>, vector<12x16x128xbf16> -> vector<12x16x384xbf16>
    %9 = vector.extract_strided_slice %8 {offsets = [0, 0, 0], sizes = [10, 16, 384], strides = [1, 1, 1]} : vector<12x16x384xbf16> to vector<10x16x384xbf16>
    %10 = vector.shape_cast %9 : vector<10x16x384xbf16> to vector<160x384xbf16>
    %c0_2 = arith.constant 0 : index
    %c0_3 = arith.constant 0 : index
    %c0_4 = arith.constant 0 : index
    %11 = vector.load %arg3[%c0_2, %c0_3, %c0_4] : memref<3x384x128xbf16, #tpu.memory_space<vmem>>, vector<1x384x128xbf16>
    %12 = vector.shape_cast %11 : vector<1x384x128xbf16> to vector<384x128xbf16>
    %cst = arith.constant dense<0.000000e+00> : vector<160x128xf32>
    %13 = tpu.matmul %10, %12, %cst {dimension_numbers = #tpu.dot_dimension_numbers<[1], [0], [0], [1], [0, 0, 1, 1], [], []>} : vector<160x384xbf16>, vector<384x128xbf16>, vector<160x128xf32> -> vector<160x128xf32>
    %14 = vector.extract_strided_slice %8 {offsets = [1, 0, 0], sizes = [10, 16, 384], strides = [1, 1, 1]} : vector<12x16x384xbf16> to vector<10x16x384xbf16>
    %15 = vector.shape_cast %14 : vector<10x16x384xbf16> to vector<160x384xbf16>
    %c1 = arith.constant 1 : index
    %c0_5 = arith.constant 0 : index
    %c0_6 = arith.constant 0 : index
    %16 = vector.load %arg3[%c1, %c0_5, %c0_6] : memref<3x384x128xbf16, #tpu.memory_space<vmem>>, vector<1x384x128xbf16>
    %17 = vector.shape_cast %16 : vector<1x384x128xbf16> to vector<384x128xbf16>
    %cst_7 = arith.constant dense<0.000000e+00> : vector<160x128xf32>
    %18 = tpu.matmul %15, %17, %cst_7 {dimension_numbers = #tpu.dot_dimension_numbers<[1], [0], [0], [1], [0, 0, 1, 1], [], []>} : vector<160x384xbf16>, vector<384x128xbf16>, vector<160x128xf32> -> vector<160x128xf32>
    %19 = arith.addf %13, %18 : vector<160x128xf32>
    %20 = vector.extract_strided_slice %8 {offsets = [2, 0, 0], sizes = [10, 16, 384], strides = [1, 1, 1]} : vector<12x16x384xbf16> to vector<10x16x384xbf16>
    %21 = vector.shape_cast %20 : vector<10x16x384xbf16> to vector<160x384xbf16>
    %c2 = arith.constant 2 : index
    %c0_8 = arith.constant 0 : index
    %c0_9 = arith.constant 0 : index
    %22 = vector.load %arg3[%c2, %c0_8, %c0_9] : memref<3x384x128xbf16, #tpu.memory_space<vmem>>, vector<1x384x128xbf16>
    %23 = vector.shape_cast %22 : vector<1x384x128xbf16> to vector<384x128xbf16>
    %cst_10 = arith.constant dense<0.000000e+00> : vector<160x128xf32>
    %24 = tpu.matmul %21, %23, %cst_10 {dimension_numbers = #tpu.dot_dimension_numbers<[1], [0], [0], [1], [0, 0, 1, 1], [], []>} : vector<160x384xbf16>, vector<384x128xbf16>, vector<160x128xf32> -> vector<160x128xf32>
    %25 = arith.addf %19, %24 : vector<160x128xf32>
    %c0_11 = arith.constant 0 : index
    %c0_12 = arith.constant 0 : index
    %26 = vector.load %arg4[%c0_11, %c0_12] : memref<1x128xf32, #tpu.memory_space<vmem>>, vector<1x128xf32>
    %27 = vector.broadcast %26 : vector<1x128xf32> to vector<160x128xf32>
    %28 = arith.addf %25, %27 : vector<160x128xf32>
    %cst_13 = arith.constant 0.000000e+00 : f32
    %29 = vector.broadcast %cst_13 : f32 to vector<160x128xf32>
    %30 = arith.maximumf %28, %29 : vector<160x128xf32>
    %31 = vector.shape_cast %30 : vector<160x128xf32> to vector<10x16x128xf32>
    %32 = tpu.iota {dimensions = array<i32: 0>} : vector<10x1x128xi32>
    %c0_i32 = arith.constant 0 : i32
    %33 = vector.broadcast %c0_i32 : i32 to vector<10x1x128xi32>
    %34 = arith.cmpi sgt, %32, %33 : vector<10x1x128xi32>
    %c0_i32_14 = arith.constant 0 : i32
    %35 = arith.cmpi sgt, %arg1, %c0_i32_14 : i32
    %36 = vector.broadcast %35 : i1 to vector<10x1x128xi1>
    %37 = arith.ori %34, %36 : vector<10x1x128xi1>
    %c9_i32 = arith.constant 9 : i32
    %38 = vector.broadcast %c9_i32 : i32 to vector<10x1x128xi32>
    %39 = arith.cmpi slt, %32, %38 : vector<10x1x128xi32>
    %c1_i32 = arith.constant 1 : i32
    %40 = arith.cmpi slt, %arg1, %c1_i32 : i32
    %41 = vector.broadcast %40 : i1 to vector<10x1x128xi1>
    %42 = arith.ori %39, %41 : vector<10x1x128xi1>
    %43 = arith.andi %37, %42 : vector<10x1x128xi1>
    %cst_15 = arith.constant 0.000000e+00 : f32
    %44 = vector.shape_cast %43 : vector<10x1x128xi1> to vector<10x1x128xi1>
    %45 = vector.broadcast %44 : vector<10x1x128xi1> to vector<10x16x128xi1>
    %46 = vector.broadcast %cst_15 : f32 to vector<10x16x128xf32>
    %47 = arith.select %45, %31, %46 : vector<10x16x128xi1>, vector<10x16x128xf32>
    %48 = arith.truncf %47 : vector<10x16x128xf32> to vector<10x16x128xbf16>
    %cst_16 = arith.constant 0.000000e+00 : bf16
    %49 = vector.broadcast %cst_16 : bf16 to vector<10x1x128xbf16>
    %50 = vector.extract_strided_slice %48 {offsets = [0, 0, 0], sizes = [10, 15, 128], strides = [1, 1, 1]} : vector<10x16x128xbf16> to vector<10x15x128xbf16>
    %51 = tpu.concatenate %49, %50 in 1 : vector<10x1x128xbf16>, vector<10x15x128xbf16> -> vector<10x16x128xbf16>
    %52 = vector.extract_strided_slice %48 {offsets = [0, 1, 0], sizes = [10, 15, 128], strides = [1, 1, 1]} : vector<10x16x128xbf16> to vector<10x15x128xbf16>
    %53 = tpu.concatenate %52, %49 in 1 : vector<10x15x128xbf16>, vector<10x1x128xbf16> -> vector<10x16x128xbf16>
    %54 = tpu.concatenate %51, %48, %53 in 2 : vector<10x16x128xbf16>, vector<10x16x128xbf16>, vector<10x16x128xbf16> -> vector<10x16x384xbf16>
    %55 = vector.extract_strided_slice %54 {offsets = [0, 0, 0], sizes = [8, 16, 384], strides = [1, 1, 1]} : vector<10x16x384xbf16> to vector<8x16x384xbf16>
    %56 = vector.shape_cast %55 : vector<8x16x384xbf16> to vector<128x384xbf16>
    %c0_17 = arith.constant 0 : index
    %c0_18 = arith.constant 0 : index
    %c0_19 = arith.constant 0 : index
    %57 = vector.load %arg5[%c0_17, %c0_18, %c0_19] : memref<3x384x128xbf16, #tpu.memory_space<vmem>>, vector<1x384x128xbf16>
    %58 = vector.shape_cast %57 : vector<1x384x128xbf16> to vector<384x128xbf16>
    %cst_20 = arith.constant dense<0.000000e+00> : vector<128x128xf32>
    %59 = tpu.matmul %56, %58, %cst_20 {dimension_numbers = #tpu.dot_dimension_numbers<[1], [0], [0], [1], [0, 0, 1, 1], [], []>} : vector<128x384xbf16>, vector<384x128xbf16>, vector<128x128xf32> -> vector<128x128xf32>
    %60 = vector.extract_strided_slice %54 {offsets = [1, 0, 0], sizes = [8, 16, 384], strides = [1, 1, 1]} : vector<10x16x384xbf16> to vector<8x16x384xbf16>
    %61 = vector.shape_cast %60 : vector<8x16x384xbf16> to vector<128x384xbf16>
    %c1_21 = arith.constant 1 : index
    %c0_22 = arith.constant 0 : index
    %c0_23 = arith.constant 0 : index
    %62 = vector.load %arg5[%c1_21, %c0_22, %c0_23] : memref<3x384x128xbf16, #tpu.memory_space<vmem>>, vector<1x384x128xbf16>
    %63 = vector.shape_cast %62 : vector<1x384x128xbf16> to vector<384x128xbf16>
    %cst_24 = arith.constant dense<0.000000e+00> : vector<128x128xf32>
    %64 = tpu.matmul %61, %63, %cst_24 {dimension_numbers = #tpu.dot_dimension_numbers<[1], [0], [0], [1], [0, 0, 1, 1], [], []>} : vector<128x384xbf16>, vector<384x128xbf16>, vector<128x128xf32> -> vector<128x128xf32>
    %65 = arith.addf %59, %64 : vector<128x128xf32>
    %66 = vector.extract_strided_slice %54 {offsets = [2, 0, 0], sizes = [8, 16, 384], strides = [1, 1, 1]} : vector<10x16x384xbf16> to vector<8x16x384xbf16>
    %67 = vector.shape_cast %66 : vector<8x16x384xbf16> to vector<128x384xbf16>
    %c2_25 = arith.constant 2 : index
    %c0_26 = arith.constant 0 : index
    %c0_27 = arith.constant 0 : index
    %68 = vector.load %arg5[%c2_25, %c0_26, %c0_27] : memref<3x384x128xbf16, #tpu.memory_space<vmem>>, vector<1x384x128xbf16>
    %69 = vector.shape_cast %68 : vector<1x384x128xbf16> to vector<384x128xbf16>
    %cst_28 = arith.constant dense<0.000000e+00> : vector<128x128xf32>
    %70 = tpu.matmul %67, %69, %cst_28 {dimension_numbers = #tpu.dot_dimension_numbers<[1], [0], [0], [1], [0, 0, 1, 1], [], []>} : vector<128x384xbf16>, vector<384x128xbf16>, vector<128x128xf32> -> vector<128x128xf32>
    %71 = arith.addf %65, %70 : vector<128x128xf32>
    %72 = vector.extract_strided_slice %3 {offsets = [2, 1, 0], sizes = [8, 16, 128], strides = [1, 1, 1]} : vector<12x18x128xf32> to vector<8x16x128xf32>
    %73 = vector.shape_cast %72 : vector<8x16x128xf32> to vector<128x128xf32>
    %c0_29 = arith.constant 0 : index
    %c0_30 = arith.constant 0 : index
    %74 = vector.load %arg6[%c0_29, %c0_30] : memref<1x128xf32, #tpu.memory_space<vmem>>, vector<1x128xf32>
    %75 = vector.broadcast %74 : vector<1x128xf32> to vector<128x128xf32>
    %76 = arith.addf %71, %75 : vector<128x128xf32>
    %77 = arith.addf %76, %73 : vector<128x128xf32>
    %cst_31 = arith.constant 0.000000e+00 : f32
    %78 = vector.broadcast %cst_31 : f32 to vector<128x128xf32>
    %79 = arith.maximumf %77, %78 : vector<128x128xf32>
    %80 = vector.shape_cast %79 : vector<128x128xf32> to vector<8x16x128xf32>
    %c0_32 = arith.constant 0 : index
    %c0_33 = arith.constant 0 : index
    %c0_34 = arith.constant 0 : index
    %c0_35 = arith.constant 0 : index
    %81 = vector.load %arg7[%c0_32, %c0_33, %c0_34, %c0_35] : memref<1x8x16x128xf32, #tpu.memory_space<vmem>>, vector<1x8x16x128xf32>
    %82 = vector.shape_cast %81 : vector<1x8x16x128xf32> to vector<8x16x128xf32>
    %83 = vector.shape_cast %80 : vector<8x16x128xf32> to vector<1x8x16x128xf32>
    tpu.vector_store %arg7[%c0_32, %c0_33, %c0_34, %c0_35], %83 {strides = array<i32>} : memref<1x8x16x128xf32, #tpu.memory_space<vmem>>, vector<1x8x16x128xf32>,
    return
  }
  func.func @transform_0(%arg0: i32, %arg1: i32) -> (i32, i32, i32, i32) {
    %c0_i32 = arith.constant 0 : i32
    %c0_i32_0 = arith.constant 0 : i32
    %c0_i32_1 = arith.constant 0 : i32
    %c0_i32_2 = arith.constant 0 : i32
    return %arg0, %c0_i32, %c0_i32_0, %c0_i32_1 : i32, i32, i32, i32
  }
  func.func @transform_1(%arg0: i32, %arg1: i32) -> (i32, i32, i32) {
    %c0_i32 = arith.constant 0 : i32
    %c0_i32_0 = arith.constant 0 : i32
    %c0_i32_1 = arith.constant 0 : i32
    %c0_i32_2 = arith.constant 0 : i32
    return %c0_i32, %c0_i32_0, %c0_i32_1 : i32, i32, i32
  }
  func.func @transform_2(%arg0: i32, %arg1: i32) -> (i32, i32) {
    %c0_i32 = arith.constant 0 : i32
    %c0_i32_0 = arith.constant 0 : i32
    %c0_i32_1 = arith.constant 0 : i32
    return %c0_i32, %c0_i32_0 : i32, i32
  }
  func.func @transform_3(%arg0: i32, %arg1: i32) -> (i32, i32, i32) {
    %c0_i32 = arith.constant 0 : i32
    %c0_i32_0 = arith.constant 0 : i32
    %c0_i32_1 = arith.constant 0 : i32
    %c0_i32_2 = arith.constant 0 : i32
    return %c0_i32, %c0_i32_0, %c0_i32_1 : i32, i32, i32
  }
  func.func @transform_4(%arg0: i32, %arg1: i32) -> (i32, i32) {
    %c0_i32 = arith.constant 0 : i32
    %c0_i32_0 = arith.constant 0 : i32
    %c0_i32_1 = arith.constant 0 : i32
    return %c0_i32, %c0_i32_0 : i32, i32
  }
  func.func @transform_5(%arg0: i32, %arg1: i32) -> (i32, i32, i32, i32) {
    %c0_i32 = arith.constant 0 : i32
    %c0_i32_0 = arith.constant 0 : i32
    %c0_i32_1 = arith.constant 0 : i32
    return %arg0, %arg1, %c0_i32, %c0_i32_0 : i32, i32, i32, i32
  }
}

</mosaic_0001>

<llo_original>
// kernel: tpu_custom_call.1
$region0: #{tpu_custom_call.1}
  #allocation0 [shape = 'u32[]', space=smem, size = 0x4, offset = 0x4, fixed_abs, tag = 'smem constant byte address 0x4 - core index']
  #allocation1 [shape = 'u32[144,128]{1,0:T(1,128)}', space=vmem, size = 0x12000, scoped, tag = 'internal scratch']
  %s0 = inlined_call_operand.vmem [shape: f32[2,20,18,128], index: 0, kind: input, shape index: {}]
  %s1 = inlined_call_operand.vmem [shape: bf16[3,384,128], index: 1, kind: input, shape index: {}]
  %s2 = inlined_call_operand.vmem [shape: f32[1,128], index: 2, kind: input, shape index: {}]
  %s3 = inlined_call_operand.vmem [shape: bf16[3,384,128], index: 3, kind: input, shape index: {}]
  %s4 = inlined_call_operand.vmem [shape: f32[1,128], index: 4, kind: input, shape index: {}]
  %s5 = inlined_call_operand.hbm [shape: f32[2,16,16,128], index: 5, kind: output, shape index: {}]
  %s6 = sld [smem:[#allocation0]]
  $region53: #{tpu_custom_call.1} parent=0
    _
  %s8 = ssub.s32 1, %s6
  %s9 = scalar_select 0, %s8, %s6
  $region1: #{tpu_custom_call.1} parent=0
    #allocation2 [shape = 'u8[131072]{0}', space=vmem, size = 0x20000, scoped, tag = 'output window, operand 0']
    #allocation3 [shape = 's32[2]{0}', space=sflag, size = 0x8, scoped, tag = 'scoped memory for tpu_custom_call.1']
    %10 = vsyncpa [#allocation3], 0
    %s11 = scalar_lea.sflag [#allocation3], 1
    %12 = vsyncpa %s11, 0
    loop: start=0, step=1, limit=6
    $region2: #{tpu_custom_call.1} parent=1 // loop_pre_header
      _
    $region3: #{tpu_custom_call.1} parent=1 // loop_header
      %s14 = sphi 0, %s18
      %p15 = scmp.ge.s32.totalorder %s14, 6
      %s21 = sphi 0, %s33
      %s22 = sphi 0, %s29
      %s23 = sphi 0, %s21
      %s24 = sphi 0, %s22
      %s25 = sphi 0, %s23
      %s26 = sphi 0, %s24
      %s36 = sphi 0, %s38
      %s39 = sphi 0, %s36
      %s40 = sphi 0, %s39
      %s56 = sphi 0, %s40
      %s60 = sphi 0, %s60
      %s62 = sphi 0, %s60
      %s63 = sphi 0, %s62
      %s77 = sphi 0, %s63
      %s81 = sphi 0, %s81
      %s83 = sphi 0, %s81
      %s84 = sphi 0, %s83
      %s98 = sphi 0, %s84
      %s102 = sphi 0, %s102
      %s104 = sphi 0, %s102
      %s105 = sphi 0, %s104
      %s119 = sphi 0, %s105
      %s123 = sphi 0, %s123
      %s125 = sphi 0, %s123
      %s126 = sphi 0, %s125
      %s140 = sphi 0, %s126
      %s148 = sphi 0, %s150
      %s151 = sphi 0, %s148
      %s152 = sphi 0, %s151
      %s168 = sphi 0, %s152
    $region4: #{tpu_custom_call.1} parent=1 // loop_header_branch
      %17 = sbr.rel (%p15) target = $region8
    $region5: #{tpu_custom_call.1} parent=1 // loop_body
      %s19 = ssub.s32 %s14, 1
      %s20 = ssub.s32 %s14, 2
      %s27 = sadd.s32 1, %s22
      %p28 = scmp.ge.s32.totalorder %s27, 2
      %s29 = scalar_select %p28, 0, %s27
      %s30 = sadd.s32 1, %s21
      %s31 = scalar_select %p28, %s30, %s21
      %p32 = scmp.ge.s32.totalorder %s31, 2
      %s33 = scalar_select %p32, 0, %s31
      %s34 = ssub.s32 %s21, %s33
      %p35 = scmp.eq.s32.totalorder %s34, 0
      %s37 = sadd.s32 %s36, 1
      %s38 = scalar_select %p35, %s36, %s37
      %p41 = pneg %p35
      %p42 = scmp.eq.s32.totalorder %s14, 3
      %p43 = por %p41, %p42
      %p44 = scmp.ne.s32.totalorder %s36, %s39
      %p45 = scmp.eq.s32.totalorder %s14, 0
      %p46 = por %p44, %p45
      %p47 = scmp.ne.s32.totalorder %s36, %s39
      %p48 = scmp.eq.s32.totalorder %s19, 3
      %p49 = por %p47, %p48
      %p50 = scmp.ne.s32.totalorder %s39, %s40
      %p51 = scmp.eq.s32.totalorder %s19, 0
      %p52 = por %p50, %p51
      %p53 = scmp.ne.s32.totalorder %s39, %s40
      %p54 = scmp.eq.s32.totalorder %s20, 3
      %p55 = por %p53, %p54
      %p57 = scmp.ne.s32.totalorder %s40, %s56
      %p58 = scmp.eq.s32.totalorder %s20, 0
      %p59 = por %p57, %p58
      %s61 = sadd.s32 %s60, 1
      %p64 = scmp.eq.s32.totalorder %s14, 3
      %p65 = scmp.ne.s32.totalorder %s60, %s62
      %p66 = scmp.eq.s32.totalorder %s14, 0
      %p67 = por %p65, %p66
      %p68 = scmp.ne.s32.totalorder %s60, %s62
      %p69 = scmp.eq.s32.totalorder %s19, 3
      %p70 = por %p68, %p69
      %p71 = scmp.ne.s32.totalorder %s62, %s63
      %p72 = scmp.eq.s32.totalorder %s19, 0
      %p73 = por %p71, %p72
      %p74 = scmp.ne.s32.totalorder %s62, %s63
      %p75 = scmp.eq.s32.totalorder %s20, 3
      %p76 = por %p74, %p75
      %p78 = scmp.ne.s32.totalorder %s63, %s77
      %p79 = scmp.eq.s32.totalorder %s20, 0
      %p80 = por %p78, %p79
      %s82 = sadd.s32 %s81, 1
      %p85 = scmp.eq.s32.totalorder %s14, 3
      %p86 = scmp.ne.s32.totalorder %s81, %s83
      %p87 = scmp.eq.s32.totalorder %s14, 0
      %p88 = por %p86, %p87
      %p89 = scmp.ne.s32.totalorder %s81, %s83
      %p90 = scmp.eq.s32.totalorder %s19, 3
      %p91 = por %p89, %p90
      %p92 = scmp.ne.s32.totalorder %s83, %s84
      %p93 = scmp.eq.s32.totalorder %s19, 0
      %p94 = por %p92, %p93
      %p95 = scmp.ne.s32.totalorder %s83, %s84
      %p96 = scmp.eq.s32.totalorder %s20, 3
      %p97 = por %p95, %p96
      %p99 = scmp.ne.s32.totalorder %s84, %s98
      %p100 = scmp.eq.s32.totalorder %s20, 0
      %p101 = por %p99, %p100
      %s103 = sadd.s32 %s102, 1
      %p106 = scmp.eq.s32.totalorder %s14, 3
      %p107 = scmp.ne.s32.totalorder %s102, %s104
      %p108 = scmp.eq.s32.totalorder %s14, 0
      %p109 = por %p107, %p108
      %p110 = scmp.ne.s32.totalorder %s102, %s104
      %p111 = scmp.eq.s32.totalorder %s19, 3
      %p112 = por %p110, %p111
      %p113 = scmp.ne.s32.totalorder %s104, %s105
      %p114 = scmp.eq.s32.totalorder %s19, 0
      %p115 = por %p113, %p114
      %p116 = scmp.ne.s32.totalorder %s104, %s105
      %p117 = scmp.eq.s32.totalorder %s20, 3
      %p118 = por %p116, %p117
      %p120 = scmp.ne.s32.totalorder %s105, %s119
      %p121 = scmp.eq.s32.totalorder %s20, 0
      %p122 = por %p120, %p121
      %s124 = sadd.s32 %s123, 1
      %p127 = scmp.eq.s32.totalorder %s14, 3
      %p128 = scmp.ne.s32.totalorder %s123, %s125
      %p129 = scmp.eq.s32.totalorder %s14, 0
      %p130 = por %p128, %p129
      %p131 = scmp.ne.s32.totalorder %s123, %s125
      %p132 = scmp.eq.s32.totalorder %s19, 3
      %p133 = por %p131, %p132
      %p134 = scmp.ne.s32.totalorder %s125, %s126
      %p135 = scmp.eq.s32.totalorder %s19, 0
      %p136 = por %p134, %p135
      %p137 = scmp.ne.s32.totalorder %s125, %s126
      %p138 = scmp.eq.s32.totalorder %s20, 3
      %p139 = por %p137, %p138
      %p141 = scmp.ne.s32.totalorder %s126, %s140
      %p142 = scmp.eq.s32.totalorder %s20, 0
      %p143 = por %p141, %p142
      %s144 = ssub.s32 %s21, %s33
      %s145 = ssub.s32 %s22, %s29
      %s146 = sor.u32 %s144, %s145
      %p147 = scmp.eq.s32.totalorder %s146, 0
      %s149 = sadd.s32 %s148, 1
      %s150 = scalar_select %p147, %s148, %s149
      %p153 = pneg %p147
      %p154 = scmp.eq.s32.totalorder %s14, 3
      %p155 = por %p153, %p154
      %p156 = scmp.ne.s32.totalorder %s148, %s151
      %p157 = scmp.eq.s32.totalorder %s14, 0
      %p158 = por %p156, %p157
      %p159 = scmp.ne.s32.totalorder %s148, %s151
      %p160 = scmp.eq.s32.totalorder %s19, 3
      %p161 = por %p159, %p160
      %p162 = scmp.ne.s32.totalorder %s151, %s152
      %p163 = scmp.eq.s32.totalorder %s19, 0
      %p164 = por %p162, %p163
      %p165 = scmp.ne.s32.totalorder %s151, %s152
      %p166 = scmp.eq.s32.totalorder %s20, 3
      %p167 = por %p165, %p166
      %p169 = scmp.ne.s32.totalorder %s152, %s168
      %p170 = scmp.eq.s32.totalorder %s20, 0
      %p171 = por %p169, %p170
      %p172 = scmp.le.s32.totalorder 1, %s14
      %p173 = scmp.lt.s32.totalorder %s14, 5
      %p174 = pnand %p172, %p173
      %p175 = pneg %p174
      // Predicated region
      $region9: #{tpu_custom_call.1} parent=5 // pred_check
        _
      $region10: #{tpu_custom_call.1} parent=5 // pred_check_branch
        %177 = sbr.rel (%p174) target = $region12
      $region11: #{tpu_custom_call.1} parent=5 // pred_region
        %s178 = ssub.s32 %s14, 1
        // Predicated region
        $region13: #{tpu_custom_call.1} parent=11 // pred_check
          %p179 = pneg %p73
        $region14: #{tpu_custom_call.1} parent=11 // pred_check_branch
          %181 = sbr.rel (%p179) target = $region16
        $region15: #{tpu_custom_call.1} parent=11 // pred_region
          _
        $region16: #{tpu_custom_call.1} parent=11 // pred_fallthru
          _
        // Predicated region
        $region17: #{tpu_custom_call.1} parent=11 // pred_check
          %p182 = pneg %p94
        $region18: #{tpu_custom_call.1} parent=11 // pred_check_branch
          %184 = sbr.rel (%p182) target = $region20
        $region19: #{tpu_custom_call.1} parent=11 // pred_region
          _
        $region20: #{tpu_custom_call.1} parent=11 // pred_fallthru
          _
        // Predicated region
        $region21: #{tpu_custom_call.1} parent=11 // pred_check
          %p185 = pneg %p115
        $region22: #{tpu_custom_call.1} parent=11 // pred_check_branch
          %187 = sbr.rel (%p185) target = $region24
        $region23: #{tpu_custom_call.1} parent=11 // pred_region
          _
        $region24: #{tpu_custom_call.1} parent=11 // pred_fallthru
          _
        // Predicated region
        $region25: #{tpu_custom_call.1} parent=11 // pred_check
          %p188 = pneg %p136
        $region26: #{tpu_custom_call.1} parent=11 // pred_check_branch
          %190 = sbr.rel (%p188) target = $region28
        $region27: #{tpu_custom_call.1} parent=11 // pred_region
          _
        $region28: #{tpu_custom_call.1} parent=11 // pred_fallthru
          _
      $region12: #{tpu_custom_call.1} parent=5 // pred_fallthru
        _
      %p191 = scmp.lt.s32.totalorder %s14, 4
      // Predicated region
      $region29: #{tpu_custom_call.1} parent=5 // pred_check
        %p192 = pneg %p191
      $region30: #{tpu_custom_call.1} parent=5 // pred_check_branch
        %194 = sbr.rel (%p192) target = $region32
      $region31: #{tpu_custom_call.1} parent=5 // pred_region
        // Predicated region
        $region33: #{tpu_custom_call.1} parent=31 // pred_check
          %p195 = pneg %p46
        $region34: #{tpu_custom_call.1} parent=31 // pred_check_branch
          %197 = sbr.rel (%p195) target = $region36
        $region35: #{tpu_custom_call.1} parent=31 // pred_region
          %p198 = scmp.lt.s32.totalorder %s21, 1
          %s199 = scalar_select %p198, %s21, 1
          %s200 = smul.addr %s199, 60
          %s201 = smul.addr %s200, 8
          %s202 = scalar_lea.vmem %s0, %s201
        $region36: #{tpu_custom_call.1} parent=31 // pred_fallthru
          _
      $region32: #{tpu_custom_call.1} parent=5 // pred_fallthru
        _
      %p203 = scmp.le.s32.totalorder 1, %s14
      %p204 = scmp.lt.s32.totalorder %s14, 5
      %p205 = pnand %p203, %p204
      %p206 = pneg %p205
      // Predicated region
      $region37: #{tpu_custom_call.1} parent=5 // pred_check
        _
      $region38: #{tpu_custom_call.1} parent=5 // pred_check_branch
        %208 = sbr.rel (%p205) target = $region40
      $region39: #{tpu_custom_call.1} parent=5 // pred_region
        %s209 = ssub.s32 %s14, 1
        %p210 = scmp.lt.s32.totalorder %s23, 1
        %s211 = scalar_select %p210, %s23, 1
        %s212 = smul.addr %s211, 60
        %s213 = smul.addr %s212, 8
        %s214 = scalar_lea.vmem %s0, %s213
        %p215 = pneg %p52
        %p216 = pneg %p49
        %p217 = pneg %p73
        %p218 = pneg %p70
        %p219 = pneg %p94
        %p220 = pneg %p91
        %p221 = pneg %p115
        %p222 = pneg %p112
        %p223 = pneg %p136
        %p224 = pneg %p133
        %p225 = pneg %p164
        %p226 = pneg %p161
        %s227 = sand.u32 %s151, 1
        %s228 = scalar_lea.sflag [#allocation3], %s227
        %s229 = sand.u32 %s151, 1
        %s230 = smul.addr %s229, 128
        %s231 = scalar_lea.vmem [#allocation2], %s230
        %p232 = scmp.lt.s32.totalorder %s23, 1
        %s233 = scalar_select %p232, %s23, 1
        %s234 = smul.addr %s233, 60
        %s235 = smul.addr %s234, 8
        %s236 = scalar_lea.vmem %s0, %s235
        %s237 = smul.u32 8, %s24
        %s239 = smul.u32 %s24, 8
        %s240 = smul.u32 %s239, 24
        %s241 = scalar_lea.vmem %s236, %s240
        %v242 = vld [vmem:[%s241] sm:$0xff]
        %v243 = vld [vmem:[%s241 + $0x8] sm:$0xff]
        %v244 = vld [vmem:[%s241 + $0x10] sm:$0x3]
        %v245 = vld [vmem:[%s241 + $0x18] sm:$0xff]
        %v246 = vld [vmem:[%s241 + $0x20] sm:$0xff]
        %v247 = vld [vmem:[%s241 + $0x28] sm:$0x3]
        %v248 = vld [vmem:[%s241 + $0x30] sm:$0xff]
        %v249 = vld [vmem:[%s241 + $0x38] sm:$0xff]
        %v250 = vld [vmem:[%s241 + $0x40] sm:$0x3]
        %v251 = vld [vmem:[%s241 + $0x48] sm:$0xff]
        %v252 = vld [vmem:[%s241 + $0x50] sm:$0xff]
        %v253 = vld [vmem:[%s241 + $0x58] sm:$0x3]
        %v254 = vld [vmem:[%s241 + $0x60] sm:$0xff]
        %v255 = vld [vmem:[%s241 + $0x68] sm:$0xff]
        %v256 = vld [vmem:[%s241 + $0x70] sm:$0x3]
        %v257 = vld [vmem:[%s241 + $0x78] sm:$0xff]
        %v258 = vld [vmem:[%s241 + $0x80] sm:$0xff]
        %v259 = vld [vmem:[%s241 + $0x88] sm:$0x3]
        %v260 = vld [vmem:[%s241 + $0x90] sm:$0xff]
        %v261 = vld [vmem:[%s241 + $0x98] sm:$0xff]
        %v262 = vld [vmem:[%s241 + $0xa0] sm:$0x3]
        %v263 = vld [vmem:[%s241 + $0xa8] sm:$0xff]
        %v264 = vld [vmem:[%s241 + $0xb0] sm:$0xff]
        %v265 = vld [vmem:[%s241 + $0xb8] sm:$0x3]
        %v266 = vld [vmem:[%s241 + $0xc0] sm:$0xff]
        %v267 = vld [vmem:[%s241 + $0xc8] sm:$0xff]
        %v268 = vld [vmem:[%s241 + $0xd0] sm:$0x3]
        %v269 = vld [vmem:[%s241 + $0xd8] sm:$0xff]
        %v270 = vld [vmem:[%s241 + $0xe0] sm:$0xff]
        %v271 = vld [vmem:[%s241 + $0xe8] sm:$0x3]
        %v272 = vld [vmem:[%s241 + $0xf0] sm:$0xff]
        %v273 = vld [vmem:[%s241 + $0xf8] sm:$0xff]
        %v274 = vld [vmem:[%s241 + $0x100] sm:$0x3]
        %v275 = vld [vmem:[%s241 + $0x108] sm:$0xff]
        %v276 = vld [vmem:[%s241 + $0x110] sm:$0xff]
        %v277 = vld [vmem:[%s241 + $0x118] sm:$0x3]
        %v278 = vpack.c.bf16 %v243, %v242
        %v279 = vpack.c.bf16 %v244, %v244
        %v280 = vpack.c.bf16 %v246, %v245
        %v281 = vpack.c.bf16 %v247, %v247
        %v282 = vpack.c.bf16 %v249, %v248
        %v283 = vpack.c.bf16 %v250, %v250
        %v284 = vpack.c.bf16 %v252, %v251
        %v285 = vpack.c.bf16 %v253, %v253
        %v286 = vpack.c.bf16 %v255, %v254
        %v287 = vpack.c.bf16 %v256, %v256
        %v288 = vpack.c.bf16 %v258, %v257
        %v289 = vpack.c.bf16 %v259, %v259
        %v290 = vpack.c.bf16 %v261, %v260
        %v291 = vpack.c.bf16 %v262, %v262
        %v292 = vpack.c.bf16 %v264, %v263
        %v293 = vpack.c.bf16 %v265, %v265
        %v294 = vpack.c.bf16 %v267, %v266
        %v295 = vpack.c.bf16 %v268, %v268
        %v296 = vpack.c.bf16 %v270, %v269
        %v297 = vpack.c.bf16 %v271, %v271
        %v298 = vpack.c.bf16 %v273, %v272
        %v299 = vpack.c.bf16 %v274, %v274
        %v300 = vpack.c.bf16 %v276, %v275
        %v301 = vpack.c.bf16 %v277, %v277
        %vm302 = vsmask.f32 7424
        %v304 = vshrl.u32 %v278, 16
        %v306 = vshll.u32 %v278, 16
        %v308 = vrot.slane %v306, 1
        %v309 = vor.u32 %v304, %v308
        %v311 = vshll.u32 %v279, 16
        %v313 = vrot.slane %v311, 1
        %v314 = vsel %vm302, %v309, %v313
        %v316 = vshrl.u32 %v280, 16
        %v318 = vshll.u32 %v280, 16
        %v320 = vrot.slane %v318, 1
        %v321 = vor.u32 %v316, %v320
        %v323 = vshll.u32 %v281, 16
        %v325 = vrot.slane %v323, 1
        %v326 = vsel %vm302, %v321, %v325
        %v328 = vshrl.u32 %v282, 16
        %v330 = vshll.u32 %v282, 16
        %v332 = vrot.slane %v330, 1
        %v333 = vor.u32 %v328, %v332
        %v335 = vshll.u32 %v283, 16
        %v337 = vrot.slane %v335, 1
        %v338 = vsel %vm302, %v333, %v337
        %v340 = vshrl.u32 %v284, 16
        %v342 = vshll.u32 %v284, 16
        %v344 = vrot.slane %v342, 1
        %v345 = vor.u32 %v340, %v344
        %v347 = vshll.u32 %v285, 16
        %v349 = vrot.slane %v347, 1
        %v350 = vsel %vm302, %v345, %v349
        %v352 = vshrl.u32 %v286, 16
        %v354 = vshll.u32 %v286, 16
        %v356 = vrot.slane %v354, 1
        %v357 = vor.u32 %v352, %v356
        %v359 = vshll.u32 %v287, 16
        %v361 = vrot.slane %v359, 1
        %v362 = vsel %vm302, %v357, %v361
        %v364 = vshrl.u32 %v288, 16
        %v366 = vshll.u32 %v288, 16
        %v368 = vrot.slane %v366, 1
        %v369 = vor.u32 %v364, %v368
        %v371 = vshll.u32 %v289, 16
        %v373 = vrot.slane %v371, 1
        %v374 = vsel %vm302, %v369, %v373
        %v376 = vshrl.u32 %v290, 16
        %v378 = vshll.u32 %v290, 16
        %v380 = vrot.slane %v378, 1
        %v381 = vor.u32 %v376, %v380
        %v383 = vshll.u32 %v291, 16
        %v385 = vrot.slane %v383, 1
        %v386 = vsel %vm302, %v381, %v385
        %v388 = vshrl.u32 %v292, 16
        %v390 = vshll.u32 %v292, 16
        %v392 = vrot.slane %v390, 1
        %v393 = vor.u32 %v388, %v392
        %v395 = vshll.u32 %v293, 16
        %v397 = vrot.slane %v395, 1
        %v398 = vsel %vm302, %v393, %v397
        %v400 = vshrl.u32 %v294, 16
        %v402 = vshll.u32 %v294, 16
        %v404 = vrot.slane %v402, 1
        %v405 = vor.u32 %v400, %v404
        %v407 = vshll.u32 %v295, 16
        %v409 = vrot.slane %v407, 1
        %v410 = vsel %vm302, %v405, %v409
        %v412 = vshrl.u32 %v296, 16
        %v414 = vshll.u32 %v296, 16
        %v416 = vrot.slane %v414, 1
        %v417 = vor.u32 %v412, %v416
        %v419 = vshll.u32 %v297, 16
        %v421 = vrot.slane %v419, 1
        %v422 = vsel %vm302, %v417, %v421
        %v424 = vshrl.u32 %v298, 16
        %v426 = vshll.u32 %v298, 16
        %v428 = vrot.slane %v426, 1
        %v429 = vor.u32 %v424, %v428
        %v431 = vshll.u32 %v299, 16
        %v433 = vrot.slane %v431, 1
        %v434 = vsel %vm302, %v429, %v433
        %v436 = vshrl.u32 %v300, 16
        %v438 = vshll.u32 %v300, 16
        %v440 = vrot.slane %v438, 1
        %v441 = vor.u32 %v436, %v440
        %v443 = vshll.u32 %v301, 16
        %v445 = vrot.slane %v443, 1
        %v446 = vsel %vm302, %v441, %v445
        %vm483 = vcmask 1046528
        %v484 = vrot.slane %v278, 1
        %v485 = vrot.slane %v279, 1
        %v486 = vsel %vm483, %v484, %v485
        %v487 = vrot.slane %v280, 1
        %v488 = vrot.slane %v281, 1
        %v489 = vsel %vm483, %v487, %v488
        %v490 = vrot.slane %v282, 1
        %v491 = vrot.slane %v283, 1
        %v492 = vsel %vm483, %v490, %v491
        %v493 = vrot.slane %v284, 1
        %v494 = vrot.slane %v285, 1
        %v495 = vsel %vm483, %v493, %v494
        %v496 = vrot.slane %v286, 1
        %v497 = vrot.slane %v287, 1
        %v498 = vsel %vm483, %v496, %v497
        %v499 = vrot.slane %v288, 1
        %v500 = vrot.slane %v289, 1
        %v501 = vsel %vm483, %v499, %v500
        %v502 = vrot.slane %v290, 1
        %v503 = vrot.slane %v291, 1
        %v504 = vsel %vm483, %v502, %v503
        %v505 = vrot.slane %v292, 1
        %v506 = vrot.slane %v293, 1
        %v507 = vsel %vm483, %v505, %v506
        %v508 = vrot.slane %v294, 1
        %v509 = vrot.slane %v295, 1
        %v510 = vsel %vm483, %v508, %v509
        %v511 = vrot.slane %v296, 1
        %v512 = vrot.slane %v297, 1
        %v513 = vsel %vm483, %v511, %v512
        %v514 = vrot.slane %v298, 1
        %v515 = vrot.slane %v299, 1
        %v516 = vsel %vm483, %v514, %v515
        %v517 = vrot.slane %v300, 1
        %v518 = vrot.slane %v301, 1
        %v519 = vsel %vm483, %v517, %v518
        %v532 = vld [vmem:[%s1] sm:$0xf]
        %v533 = vld [vmem:[%s1 + $0x4] sm:$0xf]
        %v534 = vld [vmem:[%s1 + $0x8] sm:$0xf]
        %v535 = vld [vmem:[%s1 + $0xc] sm:$0xf]
        %v536 = vld [vmem:[%s1 + $0x10] sm:$0xf]
        %v537 = vld [vmem:[%s1 + $0x14] sm:$0xf]
        %v538 = vld [vmem:[%s1 + $0x18] sm:$0xf]
        %v539 = vld [vmem:[%s1 + $0x1c] sm:$0xf]
        %v540 = vld [vmem:[%s1 + $0x20] sm:$0xf]
        %v541 = vld [vmem:[%s1 + $0x24] sm:$0xf]
        %v542 = vld [vmem:[%s1 + $0x28] sm:$0xf]
        %v543 = vld [vmem:[%s1 + $0x2c] sm:$0xf]
        %v544 = vld [vmem:[%s1 + $0x30] sm:$0xf]
        %v545 = vld [vmem:[%s1 + $0x34] sm:$0xf]
        %v546 = vld [vmem:[%s1 + $0x38] sm:$0xf]
        %v547 = vld [vmem:[%s1 + $0x3c] sm:$0xf]
        %v548 = vld [vmem:[%s1 + $0x40] sm:$0xf]
        %v549 = vld [vmem:[%s1 + $0x44] sm:$0xf]
        %v550 = vld [vmem:[%s1 + $0x48] sm:$0xf]
        %v551 = vld [vmem:[%s1 + $0x4c] sm:$0xf]
        %v552 = vld [vmem:[%s1 + $0x50] sm:$0xf]
        %v553 = vld [vmem:[%s1 + $0x54] sm:$0xf]
        %v554 = vld [vmem:[%s1 + $0x58] sm:$0xf]
        %v555 = vld [vmem:[%s1 + $0x5c] sm:$0xf]
        %v556 = vld [vmem:[%s1 + $0x60] sm:$0xf]
        %v557 = vld [vmem:[%s1 + $0x64] sm:$0xf]
        %v558 = vld [vmem:[%s1 + $0x68] sm:$0xf]
        %v559 = vld [vmem:[%s1 + $0x6c] sm:$0xf]
        %v560 = vld [vmem:[%s1 + $0x70] sm:$0xf]
        %v561 = vld [vmem:[%s1 + $0x74] sm:$0xf]
        %v562 = vld [vmem:[%s1 + $0x78] sm:$0xf]
        %v563 = vld [vmem:[%s1 + $0x7c] sm:$0xf]
        %v564 = vld [vmem:[%s1 + $0x80] sm:$0xf]
        %v565 = vld [vmem:[%s1 + $0x84] sm:$0xf]
        %v566 = vld [vmem:[%s1 + $0x88] sm:$0xf]
        %v567 = vld [vmem:[%s1 + $0x8c] sm:$0xf]
        %v568 = vld [vmem:[%s1 + $0x90] sm:$0xf]
        %v569 = vld [vmem:[%s1 + $0x94] sm:$0xf]
        %v570 = vld [vmem:[%s1 + $0x98] sm:$0xf]
        %v571 = vld [vmem:[%s1 + $0x9c] sm:$0xf]
        %v572 = vld [vmem:[%s1 + $0xa0] sm:$0xf]
        %v573 = vld [vmem:[%s1 + $0xa4] sm:$0xf]
        %v574 = vld [vmem:[%s1 + $0xa8] sm:$0xf]
        %v575 = vld [vmem:[%s1 + $0xac] sm:$0xf]
        %v576 = vld [vmem:[%s1 + $0xb0] sm:$0xf]
        %v577 = vld [vmem:[%s1 + $0xb4] sm:$0xf]
        %v578 = vld [vmem:[%s1 + $0xb8] sm:$0xf]
        %v579 = vld [vmem:[%s1 + $0xbc] sm:$0xf]
        %s580 = scalar_lea.vmem %s1, 192
        %v581 = vld [vmem:[%s580] sm:$0xf]
        %v582 = vld [vmem:[%s580 + $0x4] sm:$0xf]
        %v583 = vld [vmem:[%s580 + $0x8] sm:$0xf]
        %v584 = vld [vmem:[%s580 + $0xc] sm:$0xf]
        %v585 = vld [vmem:[%s580 + $0x10] sm:$0xf]
        %v586 = vld [vmem:[%s580 + $0x14] sm:$0xf]
        %v587 = vld [vmem:[%s580 + $0x18] sm:$0xf]
        %v588 = vld [vmem:[%s580 + $0x1c] sm:$0xf]
        %v589 = vld [vmem:[%s580 + $0x20] sm:$0xf]
        %v590 = vld [vmem:[%s580 + $0x24] sm:$0xf]
        %v591 = vld [vmem:[%s580 + $0x28] sm:$0xf]
        %v592 = vld [vmem:[%s580 + $0x2c] sm:$0xf]
        %v593 = vld [vmem:[%s580 + $0x30] sm:$0xf]
        %v594 = vld [vmem:[%s580 + $0x34] sm:$0xf]
        %v595 = vld [vmem:[%s580 + $0x38] sm:$0xf]
        %v596 = vld [vmem:[%s580 + $0x3c] sm:$0xf]
        %v597 = vld [vmem:[%s580 + $0x40] sm:$0xf]
        %v598 = vld [vmem:[%s580 + $0x44] sm:$0xf]
        %v599 = vld [vmem:[%s580 + $0x48] sm:$0xf]
        %v600 = vld [vmem:[%s580 + $0x4c] sm:$0xf]
        %v601 = vld [vmem:[%s580 + $0x50] sm:$0xf]
        %v602 = vld [vmem:[%s580 + $0x54] sm:$0xf]
        %v603 = vld [vmem:[%s580 + $0x58] sm:$0xf]
        %v604 = vld [vmem:[%s580 + $0x5c] sm:$0xf]
        %v605 = vld [vmem:[%s580 + $0x60] sm:$0xf]
        %v606 = vld [vmem:[%s580 + $0x64] sm:$0xf]
        %v607 = vld [vmem:[%s580 + $0x68] sm:$0xf]
        %v608 = vld [vmem:[%s580 + $0x6c] sm:$0xf]
        %v609 = vld [vmem:[%s580 + $0x70] sm:$0xf]
        %v610 = vld [vmem:[%s580 + $0x74] sm:$0xf]
        %v611 = vld [vmem:[%s580 + $0x78] sm:$0xf]
        %v612 = vld [vmem:[%s580 + $0x7c] sm:$0xf]
        %v613 = vld [vmem:[%s580 + $0x80] sm:$0xf]
        %v614 = vld [vmem:[%s580 + $0x84] sm:$0xf]
        %v615 = vld [vmem:[%s580 + $0x88] sm:$0xf]
        %v616 = vld [vmem:[%s580 + $0x8c] sm:$0xf]
        %v617 = vld [vmem:[%s580 + $0x90] sm:$0xf]
        %v618 = vld [vmem:[%s580 + $0x94] sm:$0xf]
        %v619 = vld [vmem:[%s580 + $0x98] sm:$0xf]
        %v620 = vld [vmem:[%s580 + $0x9c] sm:$0xf]
        %v621 = vld [vmem:[%s580 + $0xa0] sm:$0xf]
        %v622 = vld [vmem:[%s580 + $0xa4] sm:$0xf]
        %v623 = vld [vmem:[%s580 + $0xa8] sm:$0xf]
        %v624 = vld [vmem:[%s580 + $0xac] sm:$0xf]
        %v625 = vld [vmem:[%s580 + $0xb0] sm:$0xf]
        %v626 = vld [vmem:[%s580 + $0xb4] sm:$0xf]
        %v627 = vld [vmem:[%s580 + $0xb8] sm:$0xf]
        %v628 = vld [vmem:[%s580 + $0xbc] sm:$0xf]
        %v677 = vunpack.c.l.b16 %v581
        %v678 = vunpack.c.l.b16 %v582
        %v679 = vunpack.c.l.b16 %v583
        %v680 = vunpack.c.l.b16 %v584
        %v681 = vunpack.c.l.b16 %v585
        %v682 = vunpack.c.l.b16 %v586
        %v683 = vunpack.c.l.b16 %v587
        %v684 = vunpack.c.l.b16 %v588
        %v685 = vunpack.c.l.b16 %v589
        %v686 = vunpack.c.l.b16 %v590
        %v687 = vunpack.c.l.b16 %v591
        %v688 = vunpack.c.l.b16 %v592
        %v689 = vunpack.c.l.b16 %v593
        %v690 = vunpack.c.l.b16 %v594
        %v691 = vunpack.c.l.b16 %v595
        %v692 = vunpack.c.l.b16 %v596
        %v693 = vunpack.c.l.b16 %v597
        %v694 = vunpack.c.l.b16 %v598
        %v695 = vunpack.c.l.b16 %v599
        %v696 = vunpack.c.l.b16 %v600
        %v697 = vunpack.c.l.b16 %v601
        %v698 = vunpack.c.l.b16 %v602
        %v699 = vunpack.c.l.b16 %v603
        %v700 = vunpack.c.l.b16 %v604
        %v701 = vunpack.c.l.b16 %v605
        %v702 = vunpack.c.l.b16 %v606
        %v703 = vunpack.c.l.b16 %v607
        %v704 = vunpack.c.l.b16 %v608
        %v705 = vunpack.c.l.b16 %v609
        %v706 = vunpack.c.l.b16 %v610
        %v707 = vunpack.c.l.b16 %v611
        %v708 = vunpack.c.l.b16 %v612
        %v709 = vunpack.c.l.b16 %v613
        %v710 = vunpack.c.l.b16 %v614
        %v711 = vunpack.c.l.b16 %v615
        %v712 = vunpack.c.l.b16 %v616
        %v713 = vunpack.c.l.b16 %v617
        %v714 = vunpack.c.l.b16 %v618
        %v715 = vunpack.c.l.b16 %v619
        %v716 = vunpack.c.l.b16 %v620
        %v717 = vunpack.c.l.b16 %v621
        %v718 = vunpack.c.l.b16 %v622
        %v719 = vunpack.c.l.b16 %v623
        %v720 = vunpack.c.l.b16 %v624
        %v721 = vunpack.c.l.b16 %v625
        %v722 = vunpack.c.l.b16 %v626
        %v723 = vunpack.c.l.b16 %v627
        %v724 = vunpack.c.l.b16 %v628
        %v725 = vpack.c.b16 %v678, %v677
        %v726 = vpack.c.b16 %v680, %v679
        %v727 = vpack.c.b16 %v682, %v681
        %v728 = vpack.c.b16 %v684, %v683
        %v729 = vpack.c.b16 %v686, %v685
        %v730 = vpack.c.b16 %v688, %v687
        %v731 = vpack.c.b16 %v690, %v689
        %v732 = vpack.c.b16 %v692, %v691
        %v733 = vpack.c.b16 %v694, %v693
        %v734 = vpack.c.b16 %v696, %v695
        %v735 = vpack.c.b16 %v698, %v697
        %v736 = vpack.c.b16 %v700, %v699
        %v737 = vpack.c.b16 %v702, %v701
        %v738 = vpack.c.b16 %v704, %v703
        %v739 = vpack.c.b16 %v706, %v705
        %v740 = vpack.c.b16 %v708, %v707
        %v741 = vpack.c.b16 %v710, %v709
        %v742 = vpack.c.b16 %v712, %v711
        %v743 = vpack.c.b16 %v714, %v713
        %v744 = vpack.c.b16 %v716, %v715
        %v745 = vpack.c.b16 %v718, %v717
        %v746 = vpack.c.b16 %v720, %v719
        %v747 = vpack.c.b16 %v722, %v721
        %v748 = vpack.c.b16 %v724, %v723
        %773 = vmatprep.subr.bf16.mxu0 0
        %774 = vmatpush1.bf16.msra.mxu0 %v732
        %775 = vmatprep.subr.bf16.mxu0 0
        %776 = vmatpush1.bf16.msra.mxu0 %v731
        %777 = vmatprep.subr.bf16.mxu0 0
        %778 = vmatpush1.bf16.msra.mxu0 %v730
        %779 = vmatprep.subr.bf16.mxu0 0
        %780 = vmatpush1.bf16.msra.mxu0 %v729
        %781 = vmatprep.subr.bf16.mxu0 0
        %782 = vmatpush1.bf16.msra.mxu0 %v728
        %783 = vmatprep.subr.bf16.mxu0 0
        %784 = vmatpush1.bf16.msra.mxu0 %v727
        %785 = vmatprep.subr.bf16.mxu0 0
        %786 = vmatpush1.bf16.msra.mxu0 %v726
        %787 = vmatprep.subr.bf16.mxu0 0
        %788 = vmatpush1.bf16.msra.mxu0 %v725
        %789 = vmatprep.subr.bf16.mxu0 0
        %790 = vmatpush2.bf16.msra.mxu0 %v740
        %791 = vmatprep.subr.bf16.mxu0 0
        %792 = vmatpush2.bf16.msra.mxu0 %v739
        %793 = vmatprep.subr.bf16.mxu0 0
        %794 = vmatpush2.bf16.msra.mxu0 %v738
        %795 = vmatprep.subr.bf16.mxu0 0
        %796 = vmatpush2.bf16.msra.mxu0 %v737
        %797 = vmatprep.subr.bf16.mxu0 0
        %798 = vmatpush2.bf16.msra.mxu0 %v736
        %799 = vmatprep.subr.bf16.mxu0 0
        %800 = vmatpush2.bf16.msra.mxu0 %v735
        %801 = vmatprep.subr.bf16.mxu0 0
        %802 = vmatpush2.bf16.msra.mxu0 %v734
        %803 = vmatprep.subr.bf16.mxu0 0
        %804 = vmatpush2.bf16.msra.mxu0 %v733
        %805 = vmatprep.mubr.bf16.mxu0 %v326
        %806 = vmatmul.mubr.bf16.gmra.mxu0 %v280
        %v807 = vpop.f32.mrf.mxu0
        %v808 = vadd.f32 0.0, %v807
        %v809 = vpop.f32.mrf.mxu0
        %v810 = vpop.f32.mrf.mxu0
        %v811 = vadd.f32 0.0, %v810
        %v812 = vpop.f32.mrf.mxu0
        %813 = vmatprep.mubr.bf16.mxu0 %v338
        %814 = vmatmul.mubr.bf16.gmra.mxu0 %v282
        %v815 = vpop.f32.mrf.mxu0
        %v816 = vadd.f32 0.0, %v815
        %v817 = vpop.f32.mrf.mxu0
        %v818 = vpop.f32.mrf.mxu0
        %v819 = vadd.f32 0.0, %v818
        %v820 = vpop.f32.mrf.mxu0
        %821 = vmatprep.mubr.bf16.mxu0 %v350
        %822 = vmatmul.mubr.bf16.gmra.mxu0 %v284
        %v823 = vpop.f32.mrf.mxu0
        %v824 = vadd.f32 0.0, %v823
        %v825 = vpop.f32.mrf.mxu0
        %v826 = vpop.f32.mrf.mxu0
        %v827 = vadd.f32 0.0, %v826
        %v828 = vpop.f32.mrf.mxu0
        %829 = vmatprep.mubr.bf16.mxu0 %v362
        %830 = vmatmul.mubr.bf16.gmra.mxu0 %v286
        %v831 = vpop.f32.mrf.mxu0
        %v832 = vadd.f32 0.0, %v831
        %v833 = vpop.f32.mrf.mxu0
        %v834 = vpop.f32.mrf.mxu0
        %v835 = vadd.f32 0.0, %v834
        %v836 = vpop.f32.mrf.mxu0
        %837 = vmatprep.mubr.bf16.mxu0 %v374
        %838 = vmatmul.mubr.bf16.gmra.mxu0 %v288
        %v839 = vpop.f32.mrf.mxu0
        %v840 = vadd.f32 0.0, %v839
        %v841 = vpop.f32.mrf.mxu0
        %v842 = vpop.f32.mrf.mxu0
        %v843 = vadd.f32 0.0, %v842
        %v844 = vpop.f32.mrf.mxu0
        %845 = vmatprep.mubr.bf16.mxu0 %v386
        %846 = vmatmul.mubr.bf16.gmra.mxu0 %v290
        %v847 = vpop.f32.mrf.mxu0
        %v848 = vadd.f32 0.0, %v847
        %v849 = vpop.f32.mrf.mxu0
        %v850 = vpop.f32.mrf.mxu0
        %v851 = vadd.f32 0.0, %v850
        %v852 = vpop.f32.mrf.mxu0
        %853 = vmatprep.mubr.bf16.mxu0 %v398
        %854 = vmatmul.mubr.bf16.gmra.mxu0 %v292
        %v855 = vpop.f32.mrf.mxu0
        %v856 = vadd.f32 0.0, %v855
        %v857 = vpop.f32.mrf.mxu0
        %v858 = vpop.f32.mrf.mxu0
        %v859 = vadd.f32 0.0, %v858
        %v860 = vpop.f32.mrf.mxu0
        %861 = vmatprep.mubr.bf16.mxu0 %v410
        %862 = vmatmul.mubr.bf16.gmra.mxu0 %v294
        %v863 = vpop.f32.mrf.mxu0
        %v864 = vadd.f32 0.0, %v863
        %v865 = vpop.f32.mrf.mxu0
        %v866 = vpop.f32.mrf.mxu0
        %v867 = vadd.f32 0.0, %v866
        %v868 = vpop.f32.mrf.mxu0
        %869 = vmatprep.mubr.bf16.mxu0 %v422
        %870 = vmatmul.mubr.bf16.gmra.mxu0 %v296
        %v871 = vpop.f32.mrf.mxu0
        %v872 = vadd.f32 0.0, %v871
        %v873 = vpop.f32.mrf.mxu0
        %v874 = vpop.f32.mrf.mxu0
        %v875 = vadd.f32 0.0, %v874
        %v876 = vpop.f32.mrf.mxu0
        %877 = vmatprep.mubr.bf16.mxu0 %v434
        %878 = vmatmul.mubr.bf16.gmra.mxu0 %v298
        %v879 = vpop.f32.mrf.mxu0
        %v880 = vadd.f32 0.0, %v879
        %v881 = vpop.f32.mrf.mxu0
        %v882 = vpop.f32.mrf.mxu0
        %v883 = vadd.f32 0.0, %v882
        %v884 = vpop.f32.mrf.mxu0
        %885 = vdwg.mxu0
        %886 = vmatprep.subr.bf16.mxu0 0
        %887 = vmatpush1.bf16.msra.mxu0 %v748
        %888 = vmatprep.subr.bf16.mxu0 0
        %889 = vmatpush1.bf16.msra.mxu0 %v747
        %890 = vmatprep.subr.bf16.mxu0 0
        %891 = vmatpush1.bf16.msra.mxu0 %v746
        %892 = vmatprep.subr.bf16.mxu0 0
        %893 = vmatpush1.bf16.msra.mxu0 %v745
        %894 = vmatprep.subr.bf16.mxu0 0
        %895 = vmatpush1.bf16.msra.mxu0 %v744
        %896 = vmatprep.subr.bf16.mxu0 0
        %897 = vmatpush1.bf16.msra.mxu0 %v743
        %898 = vmatprep.subr.bf16.mxu0 0
        %899 = vmatpush1.bf16.msra.mxu0 %v742
        %900 = vmatprep.subr.bf16.mxu0 0
        %901 = vmatpush1.bf16.msra.mxu0 %v741
        %902 = vmatprep.subr.bf16.mxu0 0
        %903 = vmatpush2.bf16.msra.mxu0 0
        %904 = vmatprep.subr.bf16.mxu0 0
        %905 = vmatpush2.bf16.msra.mxu0 0
        %906 = vmatprep.subr.bf16.mxu0 0
        %907 = vmatpush2.bf16.msra.mxu0 0
        %908 = vmatprep.subr.bf16.mxu0 0
        %909 = vmatpush2.bf16.msra.mxu0 0
        %910 = vmatprep.subr.bf16.mxu0 0
        %911 = vmatpush2.bf16.msra.mxu0 0
        %912 = vmatprep.subr.bf16.mxu0 0
        %913 = vmatpush2.bf16.msra.mxu0 0
        %914 = vmatprep.subr.bf16.mxu0 0
        %915 = vmatpush2.bf16.msra.mxu0 0
        %916 = vmatprep.subr.bf16.mxu0 0
        %917 = vmatpush2.bf16.msra.mxu0 0
        %918 = vmatprep.mubr.bf16.mxu0 0
        %919 = vmatmul.mubr.bf16.gmra.mxu0 %v489
        %v920 = vpop.f32.mrf.mxu0
        %v921 = vadd.f32 %v808, %v920
        %v922 = vpop.f32.mrf.mxu0
        %v923 = vpop.f32.mrf.mxu0
        %v924 = vadd.f32 %v811, %v923
        %v925 = vpop.f32.mrf.mxu0
        %926 = vmatprep.mubr.bf16.mxu0 0
        %927 = vmatmul.mubr.bf16.gmra.mxu0 %v492
        %v928 = vpop.f32.mrf.mxu0
        %v929 = vadd.f32 %v816, %v928
        %v930 = vpop.f32.mrf.mxu0
        %v931 = vpop.f32.mrf.mxu0
        %v932 = vadd.f32 %v819, %v931
        %v933 = vpop.f32.mrf.mxu0
        %934 = vmatprep.mubr.bf16.mxu0 0
        %935 = vmatmul.mubr.bf16.gmra.mxu0 %v495
        %v936 = vpop.f32.mrf.mxu0
        %v937 = vadd.f32 %v824, %v936
        %v938 = vpop.f32.mrf.mxu0
        %v939 = vpop.f32.mrf.mxu0
        %v940 = vadd.f32 %v827, %v939
        %v941 = vpop.f32.mrf.mxu0
        %942 = vmatprep.mubr.bf16.mxu0 0
        %943 = vmatmul.mubr.bf16.gmra.mxu0 %v498
        %v944 = vpop.f32.mrf.mxu0
        %v945 = vadd.f32 %v832, %v944
        %v946 = vpop.f32.mrf.mxu0
        %v947 = vpop.f32.mrf.mxu0
        %v948 = vadd.f32 %v835, %v947
        %v949 = vpop.f32.mrf.mxu0
        %950 = vmatprep.mubr.bf16.mxu0 0
        %951 = vmatmul.mubr.bf16.gmra.mxu0 %v501
        %v952 = vpop.f32.mrf.mxu0
        %v953 = vadd.f32 %v840, %v952
        %v954 = vpop.f32.mrf.mxu0
        %v955 = vpop.f32.mrf.mxu0
        %v956 = vadd.f32 %v843, %v955
        %v957 = vpop.f32.mrf.mxu0
        %958 = vmatprep.mubr.bf16.mxu0 0
        %959 = vmatmul.mubr.bf16.gmra.mxu0 %v504
        %v960 = vpop.f32.mrf.mxu0
        %v961 = vadd.f32 %v848, %v960
        %v962 = vpop.f32.mrf.mxu0
        %v963 = vpop.f32.mrf.mxu0
        %v964 = vadd.f32 %v851, %v963
        %v965 = vpop.f32.mrf.mxu0
        %966 = vmatprep.mubr.bf16.mxu0 0
        %967 = vmatmul.mubr.bf16.gmra.mxu0 %v507
        %v968 = vpop.f32.mrf.mxu0
        %v969 = vadd.f32 %v856, %v968
        %v970 = vpop.f32.mrf.mxu0
        %v971 = vpop.f32.mrf.mxu0
        %v972 = vadd.f32 %v859, %v971
        %v973 = vpop.f32.mrf.mxu0
        %974 = vmatprep.mubr.bf16.mxu0 0
        %975 = vmatmul.mubr.bf16.gmra.mxu0 %v510
        %v976 = vpop.f32.mrf.mxu0
        %v977 = vadd.f32 %v864, %v976
        %v978 = vpop.f32.mrf.mxu0
        %v979 = vpop.f32.mrf.mxu0
        %v980 = vadd.f32 %v867, %v979
        %v981 = vpop.f32.mrf.mxu0
        %982 = vmatprep.mubr.bf16.mxu0 0
        %983 = vmatmul.mubr.bf16.gmra.mxu0 %v513
        %v984 = vpop.f32.mrf.mxu0
        %v985 = vadd.f32 %v872, %v984
        %v986 = vpop.f32.mrf.mxu0
        %v987 = vpop.f32.mrf.mxu0
        %v988 = vadd.f32 %v875, %v987
        %v989 = vpop.f32.mrf.mxu0
        %990 = vmatprep.mubr.bf16.mxu0 0
        %991 = vmatmul.mubr.bf16.gmra.mxu0 %v516
        %v992 = vpop.f32.mrf.mxu0
        %v993 = vadd.f32 %v880, %v992
        %v994 = vpop.f32.mrf.mxu0
        %v995 = vpop.f32.mrf.mxu0
        %v996 = vadd.f32 %v883, %v995
        %v997 = vpop.f32.mrf.mxu0
        %998 = vdwg.mxu0
        %v1047 = vunpack.c.l.b16 %v532
        %v1048 = vunpack.c.l.b16 %v533
        %v1049 = vunpack.c.l.b16 %v534
        %v1050 = vunpack.c.l.b16 %v535
        %v1051 = vunpack.c.l.b16 %v536
        %v1052 = vunpack.c.l.b16 %v537
        %v1053 = vunpack.c.l.b16 %v538
        %v1054 = vunpack.c.l.b16 %v539
        %v1055 = vunpack.c.l.b16 %v540
        %v1056 = vunpack.c.l.b16 %v541
        %v1057 = vunpack.c.l.b16 %v542
        %v1058 = vunpack.c.l.b16 %v543
        %v1059 = vunpack.c.l.b16 %v544
        %v1060 = vunpack.c.l.b16 %v545
        %v1061 = vunpack.c.l.b16 %v546
        %v1062 = vunpack.c.l.b16 %v547
        %v1063 = vunpack.c.l.b16 %v548
        %v1064 = vunpack.c.l.b16 %v549
        %v1065 = vunpack.c.l.b16 %v550
        %v1066 = vunpack.c.l.b16 %v551
        %v1067 = vunpack.c.l.b16 %v552
        %v1068 = vunpack.c.l.b16 %v553
        %v1069 = vunpack.c.l.b16 %v554
        %v1070 = vunpack.c.l.b16 %v555
        %v1071 = vunpack.c.l.b16 %v556
        %v1072 = vunpack.c.l.b16 %v557
        %v1073 = vunpack.c.l.b16 %v558
        %v1074 = vunpack.c.l.b16 %v559
        %v1075 = vunpack.c.l.b16 %v560
        %v1076 = vunpack.c.l.b16 %v561
        %v1077 = vunpack.c.l.b16 %v562
        %v1078 = vunpack.c.l.b16 %v563
        %v1079 = vunpack.c.l.b16 %v564
        %v1080 = vunpack.c.l.b16 %v565
        %v1081 = vunpack.c.l.b16 %v566
        %v1082 = vunpack.c.l.b16 %v567
        %v1083 = vunpack.c.l.b16 %v568
        %v1084 = vunpack.c.l.b16 %v569
        %v1085 = vunpack.c.l.b16 %v570
        %v1086 = vunpack.c.l.b16 %v571
        %v1087 = vunpack.c.l.b16 %v572
        %v1088 = vunpack.c.l.b16 %v573
        %v1089 = vunpack.c.l.b16 %v574
        %v1090 = vunpack.c.l.b16 %v575
        %v1091 = vunpack.c.l.b16 %v576
        %v1092 = vunpack.c.l.b16 %v577
        %v1093 = vunpack.c.l.b16 %v578
        %v1094 = vunpack.c.l.b16 %v579
        %v1095 = vpack.c.b16 %v1048, %v1047
        %v1096 = vpack.c.b16 %v1050, %v1049
        %v1097 = vpack.c.b16 %v1052, %v1051
        %v1098 = vpack.c.b16 %v1054, %v1053
        %v1099 = vpack.c.b16 %v1056, %v1055
        %v1100 = vpack.c.b16 %v1058, %v1057
        %v1101 = vpack.c.b16 %v1060, %v1059
        %v1102 = vpack.c.b16 %v1062, %v1061
        %v1103 = vpack.c.b16 %v1064, %v1063
        %v1104 = vpack.c.b16 %v1066, %v1065
        %v1105 = vpack.c.b16 %v1068, %v1067
        %v1106 = vpack.c.b16 %v1070, %v1069
        %v1107 = vpack.c.b16 %v1072, %v1071
        %v1108 = vpack.c.b16 %v1074, %v1073
        %v1109 = vpack.c.b16 %v1076, %v1075
        %v1110 = vpack.c.b16 %v1078, %v1077
        %v1111 = vpack.c.b16 %v1080, %v1079
        %v1112 = vpack.c.b16 %v1082, %v1081
        %v1113 = vpack.c.b16 %v1084, %v1083
        %v1114 = vpack.c.b16 %v1086, %v1085
        %v1115 = vpack.c.b16 %v1088, %v1087
        %v1116 = vpack.c.b16 %v1090, %v1089
        %v1117 = vpack.c.b16 %v1092, %v1091
        %v1118 = vpack.c.b16 %v1094, %v1093
        %1143 = vmatprep.subr.bf16.mxu0 0
        %1144 = vmatpush1.bf16.msra.mxu0 %v1102
        %1145 = vmatprep.subr.bf16.mxu0 0
        %1146 = vmatpush1.bf16.msra.mxu0 %v1101
        %1147 = vmatprep.subr.bf16.mxu0 0
        %1148 = vmatpush1.bf16.msra.mxu0 %v1100
        %1149 = vmatprep.subr.bf16.mxu0 0
        %1150 = vmatpush1.bf16.msra.mxu0 %v1099
        %1151 = vmatprep.subr.bf16.mxu0 0
        %1152 = vmatpush1.bf16.msra.mxu0 %v1098
        %1153 = vmatprep.subr.bf16.mxu0 0
        %1154 = vmatpush1.bf16.msra.mxu0 %v1097
        %1155 = vmatprep.subr.bf16.mxu0 0
        %1156 = vmatpush1.bf16.msra.mxu0 %v1096
        %1157 = vmatprep.subr.bf16.mxu0 0
        %1158 = vmatpush1.bf16.msra.mxu0 %v1095
        %1159 = vmatprep.subr.bf16.mxu0 0
        %1160 = vmatpush2.bf16.msra.mxu0 %v1110
        %1161 = vmatprep.subr.bf16.mxu0 0
        %1162 = vmatpush2.bf16.msra.mxu0 %v1109
        %1163 = vmatprep.subr.bf16.mxu0 0
        %1164 = vmatpush2.bf16.msra.mxu0 %v1108
        %1165 = vmatprep.subr.bf16.mxu0 0
        %1166 = vmatpush2.bf16.msra.mxu0 %v1107
        %1167 = vmatprep.subr.bf16.mxu0 0
        %1168 = vmatpush2.bf16.msra.mxu0 %v1106
        %1169 = vmatprep.subr.bf16.mxu0 0
        %1170 = vmatpush2.bf16.msra.mxu0 %v1105
        %1171 = vmatprep.subr.bf16.mxu0 0
        %1172 = vmatpush2.bf16.msra.mxu0 %v1104
        %1173 = vmatprep.subr.bf16.mxu0 0
        %1174 = vmatpush2.bf16.msra.mxu0 %v1103
        %1175 = vmatprep.mubr.bf16.mxu0 %v314
        %1176 = vmatmul.mubr.bf16.gmra.mxu0 %v278
        %v1177 = vpop.f32.mrf.mxu0
        %v1178 = vadd.f32 %v921, %v1177
        %v1179 = vpop.f32.mrf.mxu0
        %v1180 = vpop.f32.mrf.mxu0
        %v1181 = vadd.f32 %v924, %v1180
        %v1182 = vpop.f32.mrf.mxu0
        %1183 = vmatprep.mubr.bf16.mxu0 %v326
        %1184 = vmatmul.mubr.bf16.gmra.mxu0 %v280
        %v1185 = vpop.f32.mrf.mxu0
        %v1186 = vadd.f32 %v929, %v1185
        %v1187 = vpop.f32.mrf.mxu0
        %v1188 = vpop.f32.mrf.mxu0
        %v1189 = vadd.f32 %v932, %v1188
        %v1190 = vpop.f32.mrf.mxu0
        %1191 = vmatprep.mubr.bf16.mxu0 %v338
        %1192 = vmatmul.mubr.bf16.gmra.mxu0 %v282
        %v1193 = vpop.f32.mrf.mxu0
        %v1194 = vadd.f32 %v937, %v1193
        %v1195 = vpop.f32.mrf.mxu0
        %v1196 = vpop.f32.mrf.mxu0
        %v1197 = vadd.f32 %v940, %v1196
        %v1198 = vpop.f32.mrf.mxu0
        %1199 = vmatprep.mubr.bf16.mxu0 %v350
        %1200 = vmatmul.mubr.bf16.gmra.mxu0 %v284
        %v1201 = vpop.f32.mrf.mxu0
        %v1202 = vadd.f32 %v945, %v1201
        %v1203 = vpop.f32.mrf.mxu0
        %v1204 = vpop.f32.mrf.mxu0
        %v1205 = vadd.f32 %v948, %v1204
        %v1206 = vpop.f32.mrf.mxu0
        %1207 = vmatprep.mubr.bf16.mxu0 %v362
        %1208 = vmatmul.mubr.bf16.gmra.mxu0 %v286
        %v1209 = vpop.f32.mrf.mxu0
        %v1210 = vadd.f32 %v953, %v1209
        %v1211 = vpop.f32.mrf.mxu0
        %v1212 = vpop.f32.mrf.mxu0
        %v1213 = vadd.f32 %v956, %v1212
        %v1214 = vpop.f32.mrf.mxu0
        %1215 = vmatprep.mubr.bf16.mxu0 %v374
        %1216 = vmatmul.mubr.bf16.gmra.mxu0 %v288
        %v1217 = vpop.f32.mrf.mxu0
        %v1218 = vadd.f32 %v961, %v1217
        %v1219 = vpop.f32.mrf.mxu0
        %v1220 = vpop.f32.mrf.mxu0
        %v1221 = vadd.f32 %v964, %v1220
        %v1222 = vpop.f32.mrf.mxu0
        %1223 = vmatprep.mubr.bf16.mxu0 %v386
        %1224 = vmatmul.mubr.bf16.gmra.mxu0 %v290
        %v1225 = vpop.f32.mrf.mxu0
        %v1226 = vadd.f32 %v969, %v1225
        %v1227 = vpop.f32.mrf.mxu0
        %v1228 = vpop.f32.mrf.mxu0
        %v1229 = vadd.f32 %v972, %v1228
        %v1230 = vpop.f32.mrf.mxu0
        %1231 = vmatprep.mubr.bf16.mxu0 %v398
        %1232 = vmatmul.mubr.bf16.gmra.mxu0 %v292
        %v1233 = vpop.f32.mrf.mxu0
        %v1234 = vadd.f32 %v977, %v1233
        %v1235 = vpop.f32.mrf.mxu0
        %v1236 = vpop.f32.mrf.mxu0
        %v1237 = vadd.f32 %v980, %v1236
        %v1238 = vpop.f32.mrf.mxu0
        %1239 = vmatprep.mubr.bf16.mxu0 %v410
        %1240 = vmatmul.mubr.bf16.gmra.mxu0 %v294
        %v1241 = vpop.f32.mrf.mxu0
        %v1242 = vadd.f32 %v985, %v1241
        %v1243 = vpop.f32.mrf.mxu0
        %v1244 = vpop.f32.mrf.mxu0
        %v1245 = vadd.f32 %v988, %v1244
        %v1246 = vpop.f32.mrf.mxu0
        %1247 = vmatprep.mubr.bf16.mxu0 %v422
        %1248 = vmatmul.mubr.bf16.gmra.mxu0 %v296
        %v1249 = vpop.f32.mrf.mxu0
        %v1250 = vadd.f32 %v993, %v1249
        %v1251 = vpop.f32.mrf.mxu0
        %v1252 = vpop.f32.mrf.mxu0
        %v1253 = vadd.f32 %v996, %v1252
        %v1254 = vpop.f32.mrf.mxu0
        %1255 = vdwg.mxu0
        %1256 = vmatprep.subr.bf16.mxu0 0
        %1257 = vmatpush1.bf16.msra.mxu0 %v1118
        %1258 = vmatprep.subr.bf16.mxu0 0
        %1259 = vmatpush1.bf16.msra.mxu0 %v1117
        %1260 = vmatprep.subr.bf16.mxu0 0
        %1261 = vmatpush1.bf16.msra.mxu0 %v1116
        %1262 = vmatprep.subr.bf16.mxu0 0
        %1263 = vmatpush1.bf16.msra.mxu0 %v1115
        %1264 = vmatprep.subr.bf16.mxu0 0
        %1265 = vmatpush1.bf16.msra.mxu0 %v1114
        %1266 = vmatprep.subr.bf16.mxu0 0
        %1267 = vmatpush1.bf16.msra.mxu0 %v1113
        %1268 = vmatprep.subr.bf16.mxu0 0
        %1269 = vmatpush1.bf16.msra.mxu0 %v1112
        %1270 = vmatprep.subr.bf16.mxu0 0
        %1271 = vmatpush1.bf16.msra.mxu0 %v1111
        %1272 = vmatprep.subr.bf16.mxu0 0
        %1273 = vmatpush2.bf16.msra.mxu0 0
        %1274 = vmatprep.subr.bf16.mxu0 0
        %1275 = vmatpush2.bf16.msra.mxu0 0
        %1276 = vmatprep.subr.bf16.mxu0 0
        %1277 = vmatpush2.bf16.msra.mxu0 0
        %1278 = vmatprep.subr.bf16.mxu0 0
        %1279 = vmatpush2.bf16.msra.mxu0 0
        %1280 = vmatprep.subr.bf16.mxu0 0
        %1281 = vmatpush2.bf16.msra.mxu0 0
        %1282 = vmatprep.subr.bf16.mxu0 0
        %1283 = vmatpush2.bf16.msra.mxu0 0
        %1284 = vmatprep.subr.bf16.mxu0 0
        %1285 = vmatpush2.bf16.msra.mxu0 0
        %1286 = vmatprep.subr.bf16.mxu0 0
        %1287 = vmatpush2.bf16.msra.mxu0 0
        %1288 = vmatprep.mubr.bf16.mxu0 0
        %1289 = vmatmul.mubr.bf16.gmra.mxu0 %v486
        %v1290 = vpop.f32.mrf.mxu0
        %v1291 = vadd.f32 %v1178, %v1290
        %v1292 = vpop.f32.mrf.mxu0
        %v1293 = vpop.f32.mrf.mxu0
        %v1294 = vadd.f32 %v1181, %v1293
        %v1295 = vpop.f32.mrf.mxu0
        %1296 = vmatprep.mubr.bf16.mxu0 0
        %1297 = vmatmul.mubr.bf16.gmra.mxu0 %v489
        %v1298 = vpop.f32.mrf.mxu0
        %v1299 = vadd.f32 %v1186, %v1298
        %v1300 = vpop.f32.mrf.mxu0
        %v1301 = vpop.f32.mrf.mxu0
        %v1302 = vadd.f32 %v1189, %v1301
        %v1303 = vpop.f32.mrf.mxu0
        %1304 = vmatprep.mubr.bf16.mxu0 0
        %1305 = vmatmul.mubr.bf16.gmra.mxu0 %v492
        %v1306 = vpop.f32.mrf.mxu0
        %v1307 = vadd.f32 %v1194, %v1306
        %v1308 = vpop.f32.mrf.mxu0
        %v1309 = vpop.f32.mrf.mxu0
        %v1310 = vadd.f32 %v1197, %v1309
        %v1311 = vpop.f32.mrf.mxu0
        %1312 = vmatprep.mubr.bf16.mxu0 0
        %1313 = vmatmul.mubr.bf16.gmra.mxu0 %v495
        %v1314 = vpop.f32.mrf.mxu0
        %v1315 = vadd.f32 %v1202, %v1314
        %v1316 = vpop.f32.mrf.mxu0
        %v1317 = vpop.f32.mrf.mxu0
        %v1318 = vadd.f32 %v1205, %v1317
        %v1319 = vpop.f32.mrf.mxu0
        %1320 = vmatprep.mubr.bf16.mxu0 0
        %1321 = vmatmul.mubr.bf16.gmra.mxu0 %v498
        %v1322 = vpop.f32.mrf.mxu0
        %v1323 = vadd.f32 %v1210, %v1322
        %v1324 = vpop.f32.mrf.mxu0
        %v1325 = vpop.f32.mrf.mxu0
        %v1326 = vadd.f32 %v1213, %v1325
        %v1327 = vpop.f32.mrf.mxu0
        %1328 = vmatprep.mubr.bf16.mxu0 0
        %1329 = vmatmul.mubr.bf16.gmra.mxu0 %v501
        %v1330 = vpop.f32.mrf.mxu0
        %v1331 = vadd.f32 %v1218, %v1330
        %v1332 = vpop.f32.mrf.mxu0
        %v1333 = vpop.f32.mrf.mxu0
        %v1334 = vadd.f32 %v1221, %v1333
        %v1335 = vpop.f32.mrf.mxu0
        %1336 = vmatprep.mubr.bf16.mxu0 0
        %1337 = vmatmul.mubr.bf16.gmra.mxu0 %v504
        %v1338 = vpop.f32.mrf.mxu0
        %v1339 = vadd.f32 %v1226, %v1338
        %v1340 = vpop.f32.mrf.mxu0
        %v1341 = vpop.f32.mrf.mxu0
        %v1342 = vadd.f32 %v1229, %v1341
        %v1343 = vpop.f32.mrf.mxu0
        %1344 = vmatprep.mubr.bf16.mxu0 0
        %1345 = vmatmul.mubr.bf16.gmra.mxu0 %v507
        %v1346 = vpop.f32.mrf.mxu0
        %v1347 = vadd.f32 %v1234, %v1346
        %v1348 = vpop.f32.mrf.mxu0
        %v1349 = vpop.f32.mrf.mxu0
        %v1350 = vadd.f32 %v1237, %v1349
        %v1351 = vpop.f32.mrf.mxu0
        %1352 = vmatprep.mubr.bf16.mxu0 0
        %1353 = vmatmul.mubr.bf16.gmra.mxu0 %v510
        %v1354 = vpop.f32.mrf.mxu0
        %v1355 = vadd.f32 %v1242, %v1354
        %v1356 = vpop.f32.mrf.mxu0
        %v1357 = vpop.f32.mrf.mxu0
        %v1358 = vadd.f32 %v1245, %v1357
        %v1359 = vpop.f32.mrf.mxu0
        %1360 = vmatprep.mubr.bf16.mxu0 0
        %1361 = vmatmul.mubr.bf16.gmra.mxu0 %v513
        %v1362 = vpop.f32.mrf.mxu0
        %v1363 = vadd.f32 %v1250, %v1362
        %v1364 = vpop.f32.mrf.mxu0
        %v1365 = vpop.f32.mrf.mxu0
        %v1366 = vadd.f32 %v1253, %v1365
        %v1367 = vpop.f32.mrf.mxu0
        %1368 = vdwg.mxu0
        %s1369 = scalar_lea.vmem %s1, 384
        %v1370 = vld [vmem:[%s1369] sm:$0xf]
        %v1371 = vld [vmem:[%s1369 + $0x4] sm:$0xf]
        %v1372 = vld [vmem:[%s1369 + $0x8] sm:$0xf]
        %v1373 = vld [vmem:[%s1369 + $0xc] sm:$0xf]
        %v1374 = vld [vmem:[%s1369 + $0x10] sm:$0xf]
        %v1375 = vld [vmem:[%s1369 + $0x14] sm:$0xf]
        %v1376 = vld [vmem:[%s1369 + $0x18] sm:$0xf]
        %v1377 = vld [vmem:[%s1369 + $0x1c] sm:$0xf]
        %v1378 = vld [vmem:[%s1369 + $0x20] sm:$0xf]
        %v1379 = vld [vmem:[%s1369 + $0x24] sm:$0xf]
        %v1380 = vld [vmem:[%s1369 + $0x28] sm:$0xf]
        %v1381 = vld [vmem:[%s1369 + $0x2c] sm:$0xf]
        %v1382 = vld [vmem:[%s1369 + $0x30] sm:$0xf]
        %v1383 = vld [vmem:[%s1369 + $0x34] sm:$0xf]
        %v1384 = vld [vmem:[%s1369 + $0x38] sm:$0xf]
        %v1385 = vld [vmem:[%s1369 + $0x3c] sm:$0xf]
        %v1386 = vld [vmem:[%s1369 + $0x40] sm:$0xf]
        %v1387 = vld [vmem:[%s1369 + $0x44] sm:$0xf]
        %v1388 = vld [vmem:[%s1369 + $0x48] sm:$0xf]
        %v1389 = vld [vmem:[%s1369 + $0x4c] sm:$0xf]
        %v1390 = vld [vmem:[%s1369 + $0x50] sm:$0xf]
        %v1391 = vld [vmem:[%s1369 + $0x54] sm:$0xf]
        %v1392 = vld [vmem:[%s1369 + $0x58] sm:$0xf]
        %v1393 = vld [vmem:[%s1369 + $0x5c] sm:$0xf]
        %v1394 = vld [vmem:[%s1369 + $0x60] sm:$0xf]
        %v1395 = vld [vmem:[%s1369 + $0x64] sm:$0xf]
        %v1396 = vld [vmem:[%s1369 + $0x68] sm:$0xf]
        %v1397 = vld [vmem:[%s1369 + $0x6c] sm:$0xf]
        %v1398 = vld [vmem:[%s1369 + $0x70] sm:$0xf]
        %v1399 = vld [vmem:[%s1369 + $0x74] sm:$0xf]
        %v1400 = vld [vmem:[%s1369 + $0x78] sm:$0xf]
        %v1401 = vld [vmem:[%s1369 + $0x7c] sm:$0xf]
        %v1402 = vld [vmem:[%s1369 + $0x80] sm:$0xf]
        %v1403 = vld [vmem:[%s1369 + $0x84] sm:$0xf]
        %v1404 = vld [vmem:[%s1369 + $0x88] sm:$0xf]
        %v1405 = vld [vmem:[%s1369 + $0x8c] sm:$0xf]
        %v1406 = vld [vmem:[%s1369 + $0x90] sm:$0xf]
        %v1407 = vld [vmem:[%s1369 + $0x94] sm:$0xf]
        %v1408 = vld [vmem:[%s1369 + $0x98] sm:$0xf]
        %v1409 = vld [vmem:[%s1369 + $0x9c] sm:$0xf]
        %v1410 = vld [vmem:[%s1369 + $0xa0] sm:$0xf]
        %v1411 = vld [vmem:[%s1369 + $0xa4] sm:$0xf]
        %v1412 = vld [vmem:[%s1369 + $0xa8] sm:$0xf]
        %v1413 = vld [vmem:[%s1369 + $0xac] sm:$0xf]
        %v1414 = vld [vmem:[%s1369 + $0xb0] sm:$0xf]
        %v1415 = vld [vmem:[%s1369 + $0xb4] sm:$0xf]
        %v1416 = vld [vmem:[%s1369 + $0xb8] sm:$0xf]
        %v1417 = vld [vmem:[%s1369 + $0xbc] sm:$0xf]
        %v1466 = vunpack.c.l.b16 %v1370
        %v1467 = vunpack.c.l.b16 %v1371
        %v1468 = vunpack.c.l.b16 %v1372
        %v1469 = vunpack.c.l.b16 %v1373
        %v1470 = vunpack.c.l.b16 %v1374
        %v1471 = vunpack.c.l.b16 %v1375
        %v1472 = vunpack.c.l.b16 %v1376
        %v1473 = vunpack.c.l.b16 %v1377
        %v1474 = vunpack.c.l.b16 %v1378
        %v1475 = vunpack.c.l.b16 %v1379
        %v1476 = vunpack.c.l.b16 %v1380
        %v1477 = vunpack.c.l.b16 %v1381
        %v1478 = vunpack.c.l.b16 %v1382
        %v1479 = vunpack.c.l.b16 %v1383
        %v1480 = vunpack.c.l.b16 %v1384
        %v1481 = vunpack.c.l.b16 %v1385
        %v1482 = vunpack.c.l.b16 %v1386
        %v1483 = vunpack.c.l.b16 %v1387
        %v1484 = vunpack.c.l.b16 %v1388
        %v1485 = vunpack.c.l.b16 %v1389
        %v1486 = vunpack.c.l.b16 %v1390
        %v1487 = vunpack.c.l.b16 %v1391
        %v1488 = vunpack.c.l.b16 %v1392
        %v1489 = vunpack.c.l.b16 %v1393
        %v1490 = vunpack.c.l.b16 %v1394
        %v1491 = vunpack.c.l.b16 %v1395
        %v1492 = vunpack.c.l.b16 %v1396
        %v1493 = vunpack.c.l.b16 %v1397
        %v1494 = vunpack.c.l.b16 %v1398
        %v1495 = vunpack.c.l.b16 %v1399
        %v1496 = vunpack.c.l.b16 %v1400
        %v1497 = vunpack.c.l.b16 %v1401
        %v1498 = vunpack.c.l.b16 %v1402
        %v1499 = vunpack.c.l.b16 %v1403
        %v1500 = vunpack.c.l.b16 %v1404
        %v1501 = vunpack.c.l.b16 %v1405
        %v1502 = vunpack.c.l.b16 %v1406
        %v1503 = vunpack.c.l.b16 %v1407
        %v1504 = vunpack.c.l.b16 %v1408
        %v1505 = vunpack.c.l.b16 %v1409
        %v1506 = vunpack.c.l.b16 %v1410
        %v1507 = vunpack.c.l.b16 %v1411
        %v1508 = vunpack.c.l.b16 %v1412
        %v1509 = vunpack.c.l.b16 %v1413
        %v1510 = vunpack.c.l.b16 %v1414
        %v1511 = vunpack.c.l.b16 %v1415
        %v1512 = vunpack.c.l.b16 %v1416
        %v1513 = vunpack.c.l.b16 %v1417
        %v1514 = vpack.c.b16 %v1467, %v1466
        %v1515 = vpack.c.b16 %v1469, %v1468
        %v1516 = vpack.c.b16 %v1471, %v1470
        %v1517 = vpack.c.b16 %v1473, %v1472
        %v1518 = vpack.c.b16 %v1475, %v1474
        %v1519 = vpack.c.b16 %v1477, %v1476
        %v1520 = vpack.c.b16 %v1479, %v1478
        %v1521 = vpack.c.b16 %v1481, %v1480
        %v1522 = vpack.c.b16 %v1483, %v1482
        %v1523 = vpack.c.b16 %v1485, %v1484
        %v1524 = vpack.c.b16 %v1487, %v1486
        %v1525 = vpack.c.b16 %v1489, %v1488
        %v1526 = vpack.c.b16 %v1491, %v1490
        %v1527 = vpack.c.b16 %v1493, %v1492
        %v1528 = vpack.c.b16 %v1495, %v1494
        %v1529 = vpack.c.b16 %v1497, %v1496
        %v1530 = vpack.c.b16 %v1499, %v1498
        %v1531 = vpack.c.b16 %v1501, %v1500
        %v1532 = vpack.c.b16 %v1503, %v1502
        %v1533 = vpack.c.b16 %v1505, %v1504
        %v1534 = vpack.c.b16 %v1507, %v1506
        %v1535 = vpack.c.b16 %v1509, %v1508
        %v1536 = vpack.c.b16 %v1511, %v1510
        %v1537 = vpack.c.b16 %v1513, %v1512
        %1562 = vmatprep.subr.bf16.mxu0 0
        %1563 = vmatpush1.bf16.msra.mxu0 %v1521
        %1564 = vmatprep.subr.bf16.mxu0 0
        %1565 = vmatpush1.bf16.msra.mxu0 %v1520
        %1566 = vmatprep.subr.bf16.mxu0 0
        %1567 = vmatpush1.bf16.msra.mxu0 %v1519
        %1568 = vmatprep.subr.bf16.mxu0 0
        %1569 = vmatpush1.bf16.msra.mxu0 %v1518
        %1570 = vmatprep.subr.bf16.mxu0 0
        %1571 = vmatpush1.bf16.msra.mxu0 %v1517
        %1572 = vmatprep.subr.bf16.mxu0 0
        %1573 = vmatpush1.bf16.msra.mxu0 %v1516
        %1574 = vmatprep.subr.bf16.mxu0 0
        %1575 = vmatpush1.bf16.msra.mxu0 %v1515
        %1576 = vmatprep.subr.bf16.mxu0 0
        %1577 = vmatpush1.bf16.msra.mxu0 %v1514
        %1578 = vmatprep.subr.bf16.mxu0 0
        %1579 = vmatpush2.bf16.msra.mxu0 %v1529
        %1580 = vmatprep.subr.bf16.mxu0 0
        %1581 = vmatpush2.bf16.msra.mxu0 %v1528
        %1582 = vmatprep.subr.bf16.mxu0 0
        %1583 = vmatpush2.bf16.msra.mxu0 %v1527
        %1584 = vmatprep.subr.bf16.mxu0 0
        %1585 = vmatpush2.bf16.msra.mxu0 %v1526
        %1586 = vmatprep.subr.bf16.mxu0 0
        %1587 = vmatpush2.bf16.msra.mxu0 %v1525
        %1588 = vmatprep.subr.bf16.mxu0 0
        %1589 = vmatpush2.bf16.msra.mxu0 %v1524
        %1590 = vmatprep.subr.bf16.mxu0 0
        %1591 = vmatpush2.bf16.msra.mxu0 %v1523
        %1592 = vmatprep.subr.bf16.mxu0 0
        %1593 = vmatpush2.bf16.msra.mxu0 %v1522
        %1594 = vmatprep.mubr.bf16.mxu0 %v338
        %1595 = vmatmul.mubr.bf16.gmra.mxu0 %v282
        %v1596 = vpop.f32.mrf.mxu0
        %v1597 = vadd.f32 0.0, %v1596
        %v1598 = vpop.f32.mrf.mxu0
        %v1599 = vpop.f32.mrf.mxu0
        %v1600 = vadd.f32 0.0, %v1599
        %v1601 = vpop.f32.mrf.mxu0
        %1602 = vmatprep.mubr.bf16.mxu0 %v350
        %1603 = vmatmul.mubr.bf16.gmra.mxu0 %v284
        %v1604 = vpop.f32.mrf.mxu0
        %v1605 = vadd.f32 0.0, %v1604
        %v1606 = vpop.f32.mrf.mxu0
        %v1607 = vpop.f32.mrf.mxu0
        %v1608 = vadd.f32 0.0, %v1607
        %v1609 = vpop.f32.mrf.mxu0
        %1610 = vmatprep.mubr.bf16.mxu0 %v362
        %1611 = vmatmul.mubr.bf16.gmra.mxu0 %v286
        %v1612 = vpop.f32.mrf.mxu0
        %v1613 = vadd.f32 0.0, %v1612
        %v1614 = vpop.f32.mrf.mxu0
        %v1615 = vpop.f32.mrf.mxu0
        %v1616 = vadd.f32 0.0, %v1615
        %v1617 = vpop.f32.mrf.mxu0
        %1618 = vmatprep.mubr.bf16.mxu0 %v374
        %1619 = vmatmul.mubr.bf16.gmra.mxu0 %v288
        %v1620 = vpop.f32.mrf.mxu0
        %v1621 = vadd.f32 0.0, %v1620
        %v1622 = vpop.f32.mrf.mxu0
        %v1623 = vpop.f32.mrf.mxu0
        %v1624 = vadd.f32 0.0, %v1623
        %v1625 = vpop.f32.mrf.mxu0
        %1626 = vmatprep.mubr.bf16.mxu0 %v386
        %1627 = vmatmul.mubr.bf16.gmra.mxu0 %v290
        %v1628 = vpop.f32.mrf.mxu0
        %v1629 = vadd.f32 0.0, %v1628
        %v1630 = vpop.f32.mrf.mxu0
        %v1631 = vpop.f32.mrf.mxu0
        %v1632 = vadd.f32 0.0, %v1631
        %v1633 = vpop.f32.mrf.mxu0
        %1634 = vmatprep.mubr.bf16.mxu0 %v398
        %1635 = vmatmul.mubr.bf16.gmra.mxu0 %v292
        %v1636 = vpop.f32.mrf.mxu0
        %v1637 = vadd.f32 0.0, %v1636
        %v1638 = vpop.f32.mrf.mxu0
        %v1639 = vpop.f32.mrf.mxu0
        %v1640 = vadd.f32 0.0, %v1639
        %v1641 = vpop.f32.mrf.mxu0
        %1642 = vmatprep.mubr.bf16.mxu0 %v410
        %1643 = vmatmul.mubr.bf16.gmra.mxu0 %v294
        %v1644 = vpop.f32.mrf.mxu0
        %v1645 = vadd.f32 0.0, %v1644
        %v1646 = vpop.f32.mrf.mxu0
        %v1647 = vpop.f32.mrf.mxu0
        %v1648 = vadd.f32 0.0, %v1647
        %v1649 = vpop.f32.mrf.mxu0
        %1650 = vmatprep.mubr.bf16.mxu0 %v422
        %1651 = vmatmul.mubr.bf16.gmra.mxu0 %v296
        %v1652 = vpop.f32.mrf.mxu0
        %v1653 = vadd.f32 0.0, %v1652
        %v1654 = vpop.f32.mrf.mxu0
        %v1655 = vpop.f32.mrf.mxu0
        %v1656 = vadd.f32 0.0, %v1655
        %v1657 = vpop.f32.mrf.mxu0
        %1658 = vmatprep.mubr.bf16.mxu0 %v434
        %1659 = vmatmul.mubr.bf16.gmra.mxu0 %v298
        %v1660 = vpop.f32.mrf.mxu0
        %v1661 = vadd.f32 0.0, %v1660
        %v1662 = vpop.f32.mrf.mxu0
        %v1663 = vpop.f32.mrf.mxu0
        %v1664 = vadd.f32 0.0, %v1663
        %v1665 = vpop.f32.mrf.mxu0
        %1666 = vmatprep.mubr.bf16.mxu0 %v446
        %1667 = vmatmul.mubr.bf16.gmra.mxu0 %v300
        %v1668 = vpop.f32.mrf.mxu0
        %v1669 = vadd.f32 0.0, %v1668
        %v1670 = vpop.f32.mrf.mxu0
        %v1671 = vpop.f32.mrf.mxu0
        %v1672 = vadd.f32 0.0, %v1671
        %v1673 = vpop.f32.mrf.mxu0
        %1674 = vdwg.mxu0
        %1675 = vmatprep.subr.bf16.mxu0 0
        %1676 = vmatpush1.bf16.msra.mxu0 %v1537
        %1677 = vmatprep.subr.bf16.mxu0 0
        %1678 = vmatpush1.bf16.msra.mxu0 %v1536
        %1679 = vmatprep.subr.bf16.mxu0 0
        %1680 = vmatpush1.bf16.msra.mxu0 %v1535
        %1681 = vmatprep.subr.bf16.mxu0 0
        %1682 = vmatpush1.bf16.msra.mxu0 %v1534
        %1683 = vmatprep.subr.bf16.mxu0 0
        %1684 = vmatpush1.bf16.msra.mxu0 %v1533
        %1685 = vmatprep.subr.bf16.mxu0 0
        %1686 = vmatpush1.bf16.msra.mxu0 %v1532
        %1687 = vmatprep.subr.bf16.mxu0 0
        %1688 = vmatpush1.bf16.msra.mxu0 %v1531
        %1689 = vmatprep.subr.bf16.mxu0 0
        %1690 = vmatpush1.bf16.msra.mxu0 %v1530
        %1691 = vmatprep.subr.bf16.mxu0 0
        %1692 = vmatpush2.bf16.msra.mxu0 0
        %1693 = vmatprep.subr.bf16.mxu0 0
        %1694 = vmatpush2.bf16.msra.mxu0 0
        %1695 = vmatprep.subr.bf16.mxu0 0
        %1696 = vmatpush2.bf16.msra.mxu0 0
        %1697 = vmatprep.subr.bf16.mxu0 0
        %1698 = vmatpush2.bf16.msra.mxu0 0
        %1699 = vmatprep.subr.bf16.mxu0 0
        %1700 = vmatpush2.bf16.msra.mxu0 0
        %1701 = vmatprep.subr.bf16.mxu0 0
        %1702 = vmatpush2.bf16.msra.mxu0 0
        %1703 = vmatprep.subr.bf16.mxu0 0
        %1704 = vmatpush2.bf16.msra.mxu0 0
        %1705 = vmatprep.subr.bf16.mxu0 0
        %1706 = vmatpush2.bf16.msra.mxu0 0
        %1707 = vmatprep.mubr.bf16.mxu0 0
        %1708 = vmatmul.mubr.bf16.gmra.mxu0 %v492
        %v1709 = vpop.f32.mrf.mxu0
        %v1710 = vadd.f32 %v1597, %v1709
        %v1711 = vpop.f32.mrf.mxu0
        %v1712 = vpop.f32.mrf.mxu0
        %v1713 = vadd.f32 %v1600, %v1712
        %v1714 = vpop.f32.mrf.mxu0
        %1715 = vmatprep.mubr.bf16.mxu0 0
        %1716 = vmatmul.mubr.bf16.gmra.mxu0 %v495
        %v1717 = vpop.f32.mrf.mxu0
        %v1718 = vadd.f32 %v1605, %v1717
        %v1719 = vpop.f32.mrf.mxu0
        %v1720 = vpop.f32.mrf.mxu0
        %v1721 = vadd.f32 %v1608, %v1720
        %v1722 = vpop.f32.mrf.mxu0
        %1723 = vmatprep.mubr.bf16.mxu0 0
        %1724 = vmatmul.mubr.bf16.gmra.mxu0 %v498
        %v1725 = vpop.f32.mrf.mxu0
        %v1726 = vadd.f32 %v1613, %v1725
        %v1727 = vpop.f32.mrf.mxu0
        %v1728 = vpop.f32.mrf.mxu0
        %v1729 = vadd.f32 %v1616, %v1728
        %v1730 = vpop.f32.mrf.mxu0
        %1731 = vmatprep.mubr.bf16.mxu0 0
        %1732 = vmatmul.mubr.bf16.gmra.mxu0 %v501
        %v1733 = vpop.f32.mrf.mxu0
        %v1734 = vadd.f32 %v1621, %v1733
        %v1735 = vpop.f32.mrf.mxu0
        %v1736 = vpop.f32.mrf.mxu0
        %v1737 = vadd.f32 %v1624, %v1736
        %v1738 = vpop.f32.mrf.mxu0
        %1739 = vmatprep.mubr.bf16.mxu0 0
        %1740 = vmatmul.mubr.bf16.gmra.mxu0 %v504
        %v1741 = vpop.f32.mrf.mxu0
        %v1742 = vadd.f32 %v1629, %v1741
        %v1743 = vpop.f32.mrf.mxu0
        %v1744 = vpop.f32.mrf.mxu0
        %v1745 = vadd.f32 %v1632, %v1744
        %v1746 = vpop.f32.mrf.mxu0
        %1747 = vmatprep.mubr.bf16.mxu0 0
        %1748 = vmatmul.mubr.bf16.gmra.mxu0 %v507
        %v1749 = vpop.f32.mrf.mxu0
        %v1750 = vadd.f32 %v1637, %v1749
        %v1751 = vpop.f32.mrf.mxu0
        %v1752 = vpop.f32.mrf.mxu0
        %v1753 = vadd.f32 %v1640, %v1752
        %v1754 = vpop.f32.mrf.mxu0
        %1755 = vmatprep.mubr.bf16.mxu0 0
        %1756 = vmatmul.mubr.bf16.gmra.mxu0 %v510
        %v1757 = vpop.f32.mrf.mxu0
        %v1758 = vadd.f32 %v1645, %v1757
        %v1759 = vpop.f32.mrf.mxu0
        %v1760 = vpop.f32.mrf.mxu0
        %v1761 = vadd.f32 %v1648, %v1760
        %v1762 = vpop.f32.mrf.mxu0
        %1763 = vmatprep.mubr.bf16.mxu0 0
        %1764 = vmatmul.mubr.bf16.gmra.mxu0 %v513
        %v1765 = vpop.f32.mrf.mxu0
        %v1766 = vadd.f32 %v1653, %v1765
        %v1767 = vpop.f32.mrf.mxu0
        %v1768 = vpop.f32.mrf.mxu0
        %v1769 = vadd.f32 %v1656, %v1768
        %v1770 = vpop.f32.mrf.mxu0
        %1771 = vmatprep.mubr.bf16.mxu0 0
        %1772 = vmatmul.mubr.bf16.gmra.mxu0 %v516
        %v1773 = vpop.f32.mrf.mxu0
        %v1774 = vadd.f32 %v1661, %v1773
        %v1775 = vpop.f32.mrf.mxu0
        %v1776 = vpop.f32.mrf.mxu0
        %v1777 = vadd.f32 %v1664, %v1776
        %v1778 = vpop.f32.mrf.mxu0
        %1779 = vmatprep.mubr.bf16.mxu0 0
        %1780 = vmatmul.mubr.bf16.gmra.mxu0 %v519
        %v1781 = vpop.f32.mrf.mxu0
        %v1782 = vadd.f32 %v1669, %v1781
        %v1783 = vpop.f32.mrf.mxu0
        %v1784 = vpop.f32.mrf.mxu0
        %v1785 = vadd.f32 %v1672, %v1784
        %v1786 = vpop.f32.mrf.mxu0
        %1787 = vdwg.mxu0
        %v1788 = vadd.f32 %v1291, %v1710
        %v1789 = vadd.f32 %v1294, %v1713
        %v1790 = vadd.f32 %v1299, %v1718
        %v1791 = vadd.f32 %v1302, %v1721
        %v1792 = vadd.f32 %v1307, %v1726
        %v1793 = vadd.f32 %v1310, %v1729
        %v1794 = vadd.f32 %v1315, %v1734
        %v1795 = vadd.f32 %v1318, %v1737
        %v1796 = vadd.f32 %v1323, %v1742
        %v1797 = vadd.f32 %v1326, %v1745
        %v1798 = vadd.f32 %v1331, %v1750
        %v1799 = vadd.f32 %v1334, %v1753
        %v1800 = vadd.f32 %v1339, %v1758
        %v1801 = vadd.f32 %v1342, %v1761
        %v1802 = vadd.f32 %v1347, %v1766
        %v1803 = vadd.f32 %v1350, %v1769
        %v1804 = vadd.f32 %v1355, %v1774
        %v1805 = vadd.f32 %v1358, %v1777
        %v1806 = vadd.f32 %v1363, %v1782
        %v1807 = vadd.f32 %v1366, %v1785
        %v1808 = vld [vmem:[%s2] sm:$0x1]
        %v1810 = vlaneseq
        %v1811 = vshrl.u32 %v1810, 7
        %v1812 = vsub.s32 0, %v1811
        %v1813 = vrot.slane %v1808, %v1812
        %v1815 = vadd.f32 %v1788, %v1813
        %v1816 = vadd.f32 %v1789, %v1813
        %v1817 = vadd.f32 %v1790, %v1813
        %v1818 = vadd.f32 %v1791, %v1813
        %v1819 = vadd.f32 %v1792, %v1813
        %v1820 = vadd.f32 %v1793, %v1813
        %v1821 = vadd.f32 %v1794, %v1813
        %v1822 = vadd.f32 %v1795, %v1813
        %v1823 = vadd.f32 %v1796, %v1813
        %v1824 = vadd.f32 %v1797, %v1813
        %v1825 = vadd.f32 %v1798, %v1813
        %v1826 = vadd.f32 %v1799, %v1813
        %v1827 = vadd.f32 %v1800, %v1813
        %v1828 = vadd.f32 %v1801, %v1813
        %v1829 = vadd.f32 %v1802, %v1813
        %v1830 = vadd.f32 %v1803, %v1813
        %v1831 = vadd.f32 %v1804, %v1813
        %v1832 = vadd.f32 %v1805, %v1813
        %v1833 = vadd.f32 %v1806, %v1813
        %v1834 = vadd.f32 %v1807, %v1813
        %v1835 = vmax.f32 %v1815, 0.0
        %v1836 = vmax.f32 %v1816, 0.0
        %v1837 = vmax.f32 %v1817, 0.0
        %v1838 = vmax.f32 %v1818, 0.0
        %v1839 = vmax.f32 %v1819, 0.0
        %v1840 = vmax.f32 %v1820, 0.0
        %v1841 = vmax.f32 %v1821, 0.0
        %v1842 = vmax.f32 %v1822, 0.0
        %v1843 = vmax.f32 %v1823, 0.0
        %v1844 = vmax.f32 %v1824, 0.0
        %v1845 = vmax.f32 %v1825, 0.0
        %v1846 = vmax.f32 %v1826, 0.0
        %v1847 = vmax.f32 %v1827, 0.0
        %v1848 = vmax.f32 %v1828, 0.0
        %v1849 = vmax.f32 %v1829, 0.0
        %v1850 = vmax.f32 %v1830, 0.0
        %v1851 = vmax.f32 %v1831, 0.0
        %v1852 = vmax.f32 %v1832, 0.0
        %v1853 = vmax.f32 %v1833, 0.0
        %v1854 = vmax.f32 %v1834, 0.0
        %p1855 = scmp.gt.s32.totalorder %s24, 0
        %s1856 = scalar_select %p1855, 1, 0
        %v1857 = vstv %s1856
        %vm1858 = vcmp.eq.s32.totalorder %v1857, 1
        %p1859 = scmp.lt.s32.totalorder %s24, 1
        %s1860 = scalar_select %p1859, 1, 0
        %v1861 = vstv %s1860
        %vm1862 = vcmp.eq.s32.totalorder %v1861, 1
        %v1863 = vsel %vm1858, 1, 0
        %v1864 = vsel %vm1862, 1, 0
        %vm1865 = vcmp.eq.s32.totalorder %v1863, 1
        %vm1866 = vcmp.eq.s32.totalorder %v1864, 1
        %v1867 = vsel %vm1865, %v1835, 0.0
        %v1868 = vsel %vm1865, %v1836, 0.0
        %v1869 = vsel 1, %v1837, 0.0
        %v1870 = vsel 1, %v1838, 0.0
        %v1871 = vsel 1, %v1839, 0.0
        %v1872 = vsel 1, %v1840, 0.0
        %v1873 = vsel 1, %v1841, 0.0
        %v1874 = vsel 1, %v1842, 0.0
        %v1875 = vsel 1, %v1843, 0.0
        %v1876 = vsel 1, %v1844, 0.0
        %v1877 = vsel 1, %v1845, 0.0
        %v1878 = vsel 1, %v1846, 0.0
        %v1879 = vsel 1, %v1847, 0.0
        %v1880 = vsel 1, %v1848, 0.0
        %v1881 = vsel 1, %v1849, 0.0
        %v1882 = vsel 1, %v1850, 0.0
        %v1883 = vsel 1, %v1851, 0.0
        %v1884 = vsel 1, %v1852, 0.0
        %v1885 = vsel %vm1866, %v1853, 0.0
        %v1886 = vsel %vm1866, %v1854, 0.0
        %v1887 = vpack.c.bf16 %v1868, %v1867
        %v1888 = vpack.c.bf16 %v1870, %v1869
        %v1889 = vpack.c.bf16 %v1872, %v1871
        %v1890 = vpack.c.bf16 %v1874, %v1873
        %v1891 = vpack.c.bf16 %v1876, %v1875
        %v1892 = vpack.c.bf16 %v1878, %v1877
        %v1893 = vpack.c.bf16 %v1880, %v1879
        %v1894 = vpack.c.bf16 %v1882, %v1881
        %v1895 = vpack.c.bf16 %v1884, %v1883
        %v1896 = vpack.c.bf16 %v1886, %v1885
        %v1898 = vshrl.u32 %v1887, 16
        %v1900 = vrot.slane %v1898, 7
        %v1901 = vshll.u32 %v1887, 16
        %v1903 = vor.u32 %v1900, %v1901
        %v1905 = vshrl.u32 %v1888, 16
        %v1907 = vrot.slane %v1905, 7
        %v1908 = vshll.u32 %v1888, 16
        %v1910 = vor.u32 %v1907, %v1908
        %v1912 = vshrl.u32 %v1889, 16
        %v1914 = vrot.slane %v1912, 7
        %v1915 = vshll.u32 %v1889, 16
        %v1917 = vor.u32 %v1914, %v1915
        %v1919 = vshrl.u32 %v1890, 16
        %v1921 = vrot.slane %v1919, 7
        %v1922 = vshll.u32 %v1890, 16
        %v1924 = vor.u32 %v1921, %v1922
        %v1926 = vshrl.u32 %v1891, 16
        %v1928 = vrot.slane %v1926, 7
        %v1929 = vshll.u32 %v1891, 16
        %v1931 = vor.u32 %v1928, %v1929
        %v1933 = vshrl.u32 %v1892, 16
        %v1935 = vrot.slane %v1933, 7
        %v1936 = vshll.u32 %v1892, 16
        %v1938 = vor.u32 %v1935, %v1936
        %v1940 = vshrl.u32 %v1893, 16
        %v1942 = vrot.slane %v1940, 7
        %v1943 = vshll.u32 %v1893, 16
        %v1945 = vor.u32 %v1942, %v1943
        %v1947 = vshrl.u32 %v1894, 16
        %v1949 = vrot.slane %v1947, 7
        %v1950 = vshll.u32 %v1894, 16
        %v1952 = vor.u32 %v1949, %v1950
        %v1954 = vshrl.u32 %v1895, 16
        %v1956 = vrot.slane %v1954, 7
        %v1957 = vshll.u32 %v1895, 16
        %v1959 = vor.u32 %v1956, %v1957
        %v1961 = vshrl.u32 %v1896, 16
        %v1963 = vrot.slane %v1961, 7
        %v1964 = vshll.u32 %v1896, 16
        %v1966 = vor.u32 %v1963, %v1964
        %vm1977 = vcmask 1040384
        %vm1978 = vsmask.f32 256
        %vm1979 = vmand %vm1977, %vm1978
        %v1980 = vsel %vm1979, 0, %v1903
        %v1981 = vsel %vm1979, 0, %v1910
        %v1982 = vsel %vm1979, 0, %v1917
        %v1983 = vsel %vm1979, 0, %v1924
        %v1984 = vsel %vm1979, 0, %v1931
        %v1985 = vsel %vm1979, 0, %v1938
        %v1986 = vsel %vm1979, 0, %v1945
        %v1987 = vsel %vm1979, 0, %v1952
        %v1988 = vsel %vm1979, 0, %v1959
        %v1989 = vsel %vm1979, 0, %v1966
        %v1990 = vrot.slane %v1901, 1
        %v1991 = vor.u32 %v1898, %v1990
        %v1992 = vrot.slane %v1908, 1
        %v1993 = vor.u32 %v1905, %v1992
        %v1994 = vrot.slane %v1915, 1
        %v1995 = vor.u32 %v1912, %v1994
        %v1996 = vrot.slane %v1922, 1
        %v1997 = vor.u32 %v1919, %v1996
        %v1998 = vrot.slane %v1929, 1
        %v1999 = vor.u32 %v1926, %v1998
        %v2000 = vrot.slane %v1936, 1
        %v2001 = vor.u32 %v1933, %v2000
        %v2002 = vrot.slane %v1943, 1
        %v2003 = vor.u32 %v1940, %v2002
        %v2004 = vrot.slane %v1950, 1
        %v2005 = vor.u32 %v1947, %v2004
        %v2006 = vrot.slane %v1957, 1
        %v2007 = vor.u32 %v1954, %v2006
        %v2008 = vrot.slane %v1964, 1
        %v2009 = vor.u32 %v1961, %v2008
        %vm2020 = vcmask 1047552
        %vm2021 = vmand %vm2020, %vm302
        %v2022 = vsel %vm2021, %v1991, 0
        %v2023 = vsel %vm2021, %v1993, 0
        %v2024 = vsel %vm2021, %v1995, 0
        %v2025 = vsel %vm2021, %v1997, 0
        %v2026 = vsel %vm2021, %v1999, 0
        %v2027 = vsel %vm2021, %v2001, 0
        %v2028 = vsel %vm2021, %v2003, 0
        %v2029 = vsel %vm2021, %v2005, 0
        %v2030 = vsel %vm2021, %v2007, 0
        %v2031 = vsel %vm2021, %v2009, 0
        %v2032 = vld [vmem:[%s3] sm:$0xf]
        %v2033 = vld [vmem:[%s3 + $0x4] sm:$0xf]
        %v2034 = vld [vmem:[%s3 + $0x8] sm:$0xf]
        %v2035 = vld [vmem:[%s3 + $0xc] sm:$0xf]
        %v2036 = vld [vmem:[%s3 + $0x10] sm:$0xf]
        %v2037 = vld [vmem:[%s3 + $0x14] sm:$0xf]
        %v2038 = vld [vmem:[%s3 + $0x18] sm:$0xf]
        %v2039 = vld [vmem:[%s3 + $0x1c] sm:$0xf]
        %v2040 = vld [vmem:[%s3 + $0x20] sm:$0xf]
        %v2041 = vld [vmem:[%s3 + $0x24] sm:$0xf]
        %v2042 = vld [vmem:[%s3 + $0x28] sm:$0xf]
        %v2043 = vld [vmem:[%s3 + $0x2c] sm:$0xf]
        %v2044 = vld [vmem:[%s3 + $0x30] sm:$0xf]
        %v2045 = vld [vmem:[%s3 + $0x34] sm:$0xf]
        %v2046 = vld [vmem:[%s3 + $0x38] sm:$0xf]
        %v2047 = vld [vmem:[%s3 + $0x3c] sm:$0xf]
        %v2048 = vld [vmem:[%s3 + $0x40] sm:$0xf]
        %v2049 = vld [vmem:[%s3 + $0x44] sm:$0xf]
        %v2050 = vld [vmem:[%s3 + $0x48] sm:$0xf]
        %v2051 = vld [vmem:[%s3 + $0x4c] sm:$0xf]
        %v2052 = vld [vmem:[%s3 + $0x50] sm:$0xf]
        %v2053 = vld [vmem:[%s3 + $0x54] sm:$0xf]
        %v2054 = vld [vmem:[%s3 + $0x58] sm:$0xf]
        %v2055 = vld [vmem:[%s3 + $0x5c] sm:$0xf]
        %v2056 = vld [vmem:[%s3 + $0x60] sm:$0xf]
        %v2057 = vld [vmem:[%s3 + $0x64] sm:$0xf]
        %v2058 = vld [vmem:[%s3 + $0x68] sm:$0xf]
        %v2059 = vld [vmem:[%s3 + $0x6c] sm:$0xf]
        %v2060 = vld [vmem:[%s3 + $0x70] sm:$0xf]
        %v2061 = vld [vmem:[%s3 + $0x74] sm:$0xf]
        %v2062 = vld [vmem:[%s3 + $0x78] sm:$0xf]
        %v2063 = vld [vmem:[%s3 + $0x7c] sm:$0xf]
        %v2064 = vld [vmem:[%s3 + $0x80] sm:$0xf]
        %v2065 = vld [vmem:[%s3 + $0x84] sm:$0xf]
        %v2066 = vld [vmem:[%s3 + $0x88] sm:$0xf]
        %v2067 = vld [vmem:[%s3 + $0x8c] sm:$0xf]
        %v2068 = vld [vmem:[%s3 + $0x90] sm:$0xf]
        %v2069 = vld [vmem:[%s3 + $0x94] sm:$0xf]
        %v2070 = vld [vmem:[%s3 + $0x98] sm:$0xf]
        %v2071 = vld [vmem:[%s3 + $0x9c] sm:$0xf]
        %v2072 = vld [vmem:[%s3 + $0xa0] sm:$0xf]
        %v2073 = vld [vmem:[%s3 + $0xa4] sm:$0xf]
        %v2074 = vld [vmem:[%s3 + $0xa8] sm:$0xf]
        %v2075 = vld [vmem:[%s3 + $0xac] sm:$0xf]
        %v2076 = vld [vmem:[%s3 + $0xb0] sm:$0xf]
        %v2077 = vld [vmem:[%s3 + $0xb4] sm:$0xf]
        %v2078 = vld [vmem:[%s3 + $0xb8] sm:$0xf]
        %v2079 = vld [vmem:[%s3 + $0xbc] sm:$0xf]
        %s2080 = scalar_lea.vmem %s3, 192
        %v2081 = vld [vmem:[%s2080] sm:$0xf]
        %v2082 = vld [vmem:[%s2080 + $0x4] sm:$0xf]
        %v2083 = vld [vmem:[%s2080 + $0x8] sm:$0xf]
        %v2084 = vld [vmem:[%s2080 + $0xc] sm:$0xf]
        %v2085 = vld [vmem:[%s2080 + $0x10] sm:$0xf]
        %v2086 = vld [vmem:[%s2080 + $0x14] sm:$0xf]
        %v2087 = vld [vmem:[%s2080 + $0x18] sm:$0xf]
        %v2088 = vld [vmem:[%s2080 + $0x1c] sm:$0xf]
        %v2089 = vld [vmem:[%s2080 + $0x20] sm:$0xf]
        %v2090 = vld [vmem:[%s2080 + $0x24] sm:$0xf]
        %v2091 = vld [vmem:[%s2080 + $0x28] sm:$0xf]
        %v2092 = vld [vmem:[%s2080 + $0x2c] sm:$0xf]
        %v2093 = vld [vmem:[%s2080 + $0x30] sm:$0xf]
        %v2094 = vld [vmem:[%s2080 + $0x34] sm:$0xf]
        %v2095 = vld [vmem:[%s2080 + $0x38] sm:$0xf]
        %v2096 = vld [vmem:[%s2080 + $0x3c] sm:$0xf]
        %v2097 = vld [vmem:[%s2080 + $0x40] sm:$0xf]
        %v2098 = vld [vmem:[%s2080 + $0x44] sm:$0xf]
        %v2099 = vld [vmem:[%s2080 + $0x48] sm:$0xf]
        %v2100 = vld [vmem:[%s2080 + $0x4c] sm:$0xf]
        %v2101 = vld [vmem:[%s2080 + $0x50] sm:$0xf]
        %v2102 = vld [vmem:[%s2080 + $0x54] sm:$0xf]
        %v2103 = vld [vmem:[%s2080 + $0x58] sm:$0xf]
        %v2104 = vld [vmem:[%s2080 + $0x5c] sm:$0xf]
        %v2105 = vld [vmem:[%s2080 + $0x60] sm:$0xf]
        %v2106 = vld [vmem:[%s2080 + $0x64] sm:$0xf]
        %v2107 = vld [vmem:[%s2080 + $0x68] sm:$0xf]
        %v2108 = vld [vmem:[%s2080 + $0x6c] sm:$0xf]
        %v2109 = vld [vmem:[%s2080 + $0x70] sm:$0xf]
        %v2110 = vld [vmem:[%s2080 + $0x74] sm:$0xf]
        %v2111 = vld [vmem:[%s2080 + $0x78] sm:$0xf]
        %v2112 = vld [vmem:[%s2080 + $0x7c] sm:$0xf]
        %v2113 = vld [vmem:[%s2080 + $0x80] sm:$0xf]
        %v2114 = vld [vmem:[%s2080 + $0x84] sm:$0xf]
        %v2115 = vld [vmem:[%s2080 + $0x88] sm:$0xf]
        %v2116 = vld [vmem:[%s2080 + $0x8c] sm:$0xf]
        %v2117 = vld [vmem:[%s2080 + $0x90] sm:$0xf]
        %v2118 = vld [vmem:[%s2080 + $0x94] sm:$0xf]
        %v2119 = vld [vmem:[%s2080 + $0x98] sm:$0xf]
        %v2120 = vld [vmem:[%s2080 + $0x9c] sm:$0xf]
        %v2121 = vld [vmem:[%s2080 + $0xa0] sm:$0xf]
        %v2122 = vld [vmem:[%s2080 + $0xa4] sm:$0xf]
        %v2123 = vld [vmem:[%s2080 + $0xa8] sm:$0xf]
        %v2124 = vld [vmem:[%s2080 + $0xac] sm:$0xf]
        %v2125 = vld [vmem:[%s2080 + $0xb0] sm:$0xf]
        %v2126 = vld [vmem:[%s2080 + $0xb4] sm:$0xf]
        %v2127 = vld [vmem:[%s2080 + $0xb8] sm:$0xf]
        %v2128 = vld [vmem:[%s2080 + $0xbc] sm:$0xf]
        %v2177 = vunpack.c.l.b16 %v2081
        %v2178 = vunpack.c.l.b16 %v2082
        %v2179 = vunpack.c.l.b16 %v2083
        %v2180 = vunpack.c.l.b16 %v2084
        %v2181 = vunpack.c.l.b16 %v2085
        %v2182 = vunpack.c.l.b16 %v2086
        %v2183 = vunpack.c.l.b16 %v2087
        %v2184 = vunpack.c.l.b16 %v2088
        %v2185 = vunpack.c.l.b16 %v2089
        %v2186 = vunpack.c.l.b16 %v2090
        %v2187 = vunpack.c.l.b16 %v2091
        %v2188 = vunpack.c.l.b16 %v2092
        %v2189 = vunpack.c.l.b16 %v2093
        %v2190 = vunpack.c.l.b16 %v2094
        %v2191 = vunpack.c.l.b16 %v2095
        %v2192 = vunpack.c.l.b16 %v2096
        %v2193 = vunpack.c.l.b16 %v2097
        %v2194 = vunpack.c.l.b16 %v2098
        %v2195 = vunpack.c.l.b16 %v2099
        %v2196 = vunpack.c.l.b16 %v2100
        %v2197 = vunpack.c.l.b16 %v2101
        %v2198 = vunpack.c.l.b16 %v2102
        %v2199 = vunpack.c.l.b16 %v2103
        %v2200 = vunpack.c.l.b16 %v2104
        %v2201 = vunpack.c.l.b16 %v2105
        %v2202 = vunpack.c.l.b16 %v2106
        %v2203 = vunpack.c.l.b16 %v2107
        %v2204 = vunpack.c.l.b16 %v2108
        %v2205 = vunpack.c.l.b16 %v2109
        %v2206 = vunpack.c.l.b16 %v2110
        %v2207 = vunpack.c.l.b16 %v2111
        %v2208 = vunpack.c.l.b16 %v2112
        %v2209 = vunpack.c.l.b16 %v2113
        %v2210 = vunpack.c.l.b16 %v2114
        %v2211 = vunpack.c.l.b16 %v2115
        %v2212 = vunpack.c.l.b16 %v2116
        %v2213 = vunpack.c.l.b16 %v2117
        %v2214 = vunpack.c.l.b16 %v2118
        %v2215 = vunpack.c.l.b16 %v2119
        %v2216 = vunpack.c.l.b16 %v2120
        %v2217 = vunpack.c.l.b16 %v2121
        %v2218 = vunpack.c.l.b16 %v2122
        %v2219 = vunpack.c.l.b16 %v2123
        %v2220 = vunpack.c.l.b16 %v2124
        %v2221 = vunpack.c.l.b16 %v2125
        %v2222 = vunpack.c.l.b16 %v2126
        %v2223 = vunpack.c.l.b16 %v2127
        %v2224 = vunpack.c.l.b16 %v2128
        %v2225 = vpack.c.b16 %v2178, %v2177
        %v2226 = vpack.c.b16 %v2180, %v2179
        %v2227 = vpack.c.b16 %v2182, %v2181
        %v2228 = vpack.c.b16 %v2184, %v2183
        %v2229 = vpack.c.b16 %v2186, %v2185
        %v2230 = vpack.c.b16 %v2188, %v2187
        %v2231 = vpack.c.b16 %v2190, %v2189
        %v2232 = vpack.c.b16 %v2192, %v2191
        %v2233 = vpack.c.b16 %v2194, %v2193
        %v2234 = vpack.c.b16 %v2196, %v2195
        %v2235 = vpack.c.b16 %v2198, %v2197
        %v2236 = vpack.c.b16 %v2200, %v2199
        %v2237 = vpack.c.b16 %v2202, %v2201
        %v2238 = vpack.c.b16 %v2204, %v2203
        %v2239 = vpack.c.b16 %v2206, %v2205
        %v2240 = vpack.c.b16 %v2208, %v2207
        %v2241 = vpack.c.b16 %v2210, %v2209
        %v2242 = vpack.c.b16 %v2212, %v2211
        %v2243 = vpack.c.b16 %v2214, %v2213
        %v2244 = vpack.c.b16 %v2216, %v2215
        %v2245 = vpack.c.b16 %v2218, %v2217
        %v2246 = vpack.c.b16 %v2220, %v2219
        %v2247 = vpack.c.b16 %v2222, %v2221
        %v2248 = vpack.c.b16 %v2224, %v2223
        %2273 = vmatprep.subr.bf16.mxu0 0
        %2274 = vmatpush1.bf16.msra.mxu0 %v2232
        %2275 = vmatprep.subr.bf16.mxu0 0
        %2276 = vmatpush1.bf16.msra.mxu0 %v2231
        %2277 = vmatprep.subr.bf16.mxu0 0
        %2278 = vmatpush1.bf16.msra.mxu0 %v2230
        %2279 = vmatprep.subr.bf16.mxu0 0
        %2280 = vmatpush1.bf16.msra.mxu0 %v2229
        %2281 = vmatprep.subr.bf16.mxu0 0
        %2282 = vmatpush1.bf16.msra.mxu0 %v2228
        %2283 = vmatprep.subr.bf16.mxu0 0
        %2284 = vmatpush1.bf16.msra.mxu0 %v2227
        %2285 = vmatprep.subr.bf16.mxu0 0
        %2286 = vmatpush1.bf16.msra.mxu0 %v2226
        %2287 = vmatprep.subr.bf16.mxu0 0
        %2288 = vmatpush1.bf16.msra.mxu0 %v2225
        %2289 = vmatprep.subr.bf16.mxu0 0
        %2290 = vmatpush2.bf16.msra.mxu0 %v2240
        %2291 = vmatprep.subr.bf16.mxu0 0
        %2292 = vmatpush2.bf16.msra.mxu0 %v2239
        %2293 = vmatprep.subr.bf16.mxu0 0
        %2294 = vmatpush2.bf16.msra.mxu0 %v2238
        %2295 = vmatprep.subr.bf16.mxu0 0
        %2296 = vmatpush2.bf16.msra.mxu0 %v2237
        %2297 = vmatprep.subr.bf16.mxu0 0
        %2298 = vmatpush2.bf16.msra.mxu0 %v2236
        %2299 = vmatprep.subr.bf16.mxu0 0
        %2300 = vmatpush2.bf16.msra.mxu0 %v2235
        %2301 = vmatprep.subr.bf16.mxu0 0
        %2302 = vmatpush2.bf16.msra.mxu0 %v2234
        %2303 = vmatprep.subr.bf16.mxu0 0
        %2304 = vmatpush2.bf16.msra.mxu0 %v2233
        %2305 = vmatprep.mubr.bf16.mxu0 %v1888
        %2306 = vmatmul.mubr.bf16.gmra.mxu0 %v1981
        %v2307 = vpop.f32.mrf.mxu0
        %v2308 = vadd.f32 0.0, %v2307
        %v2309 = vpop.f32.mrf.mxu0
        %v2310 = vpop.f32.mrf.mxu0
        %v2311 = vadd.f32 0.0, %v2310
        %v2312 = vpop.f32.mrf.mxu0
        %2313 = vmatprep.mubr.bf16.mxu0 %v1889
        %2314 = vmatmul.mubr.bf16.gmra.mxu0 %v1982
        %v2315 = vpop.f32.mrf.mxu0
        %v2316 = vadd.f32 0.0, %v2315
        %v2317 = vpop.f32.mrf.mxu0
        %v2318 = vpop.f32.mrf.mxu0
        %v2319 = vadd.f32 0.0, %v2318
        %v2320 = vpop.f32.mrf.mxu0
        %2321 = vmatprep.mubr.bf16.mxu0 %v1890
        %2322 = vmatmul.mubr.bf16.gmra.mxu0 %v1983
        %v2323 = vpop.f32.mrf.mxu0
        %v2324 = vadd.f32 0.0, %v2323
        %v2325 = vpop.f32.mrf.mxu0
        %v2326 = vpop.f32.mrf.mxu0
        %v2327 = vadd.f32 0.0, %v2326
        %v2328 = vpop.f32.mrf.mxu0
        %2329 = vmatprep.mubr.bf16.mxu0 %v1891
        %2330 = vmatmul.mubr.bf16.gmra.mxu0 %v1984
        %v2331 = vpop.f32.mrf.mxu0
        %v2332 = vadd.f32 0.0, %v2331
        %v2333 = vpop.f32.mrf.mxu0
        %v2334 = vpop.f32.mrf.mxu0
        %v2335 = vadd.f32 0.0, %v2334
        %v2336 = vpop.f32.mrf.mxu0
        %2337 = vmatprep.mubr.bf16.mxu0 %v1892
        %2338 = vmatmul.mubr.bf16.gmra.mxu0 %v1985
        %v2339 = vpop.f32.mrf.mxu0
        %v2340 = vadd.f32 0.0, %v2339
        %v2341 = vpop.f32.mrf.mxu0
        %v2342 = vpop.f32.mrf.mxu0
        %v2343 = vadd.f32 0.0, %v2342
        %v2344 = vpop.f32.mrf.mxu0
        %2345 = vmatprep.mubr.bf16.mxu0 %v1893
        %2346 = vmatmul.mubr.bf16.gmra.mxu0 %v1986
        %v2347 = vpop.f32.mrf.mxu0
        %v2348 = vadd.f32 0.0, %v2347
        %v2349 = vpop.f32.mrf.mxu0
        %v2350 = vpop.f32.mrf.mxu0
        %v2351 = vadd.f32 0.0, %v2350
        %v2352 = vpop.f32.mrf.mxu0
        %2353 = vmatprep.mubr.bf16.mxu0 %v1894
        %2354 = vmatmul.mubr.bf16.gmra.mxu0 %v1987
        %v2355 = vpop.f32.mrf.mxu0
        %v2356 = vadd.f32 0.0, %v2355
        %v2357 = vpop.f32.mrf.mxu0
        %v2358 = vpop.f32.mrf.mxu0
        %v2359 = vadd.f32 0.0, %v2358
        %v2360 = vpop.f32.mrf.mxu0
        %2361 = vmatprep.mubr.bf16.mxu0 %v1895
        %2362 = vmatmul.mubr.bf16.gmra.mxu0 %v1988
        %v2363 = vpop.f32.mrf.mxu0
        %v2364 = vadd.f32 0.0, %v2363
        %v2365 = vpop.f32.mrf.mxu0
        %v2366 = vpop.f32.mrf.mxu0
        %v2367 = vadd.f32 0.0, %v2366
        %v2368 = vpop.f32.mrf.mxu0
        %2369 = vdwg.mxu0
        %2370 = vmatprep.subr.bf16.mxu0 0
        %2371 = vmatpush1.bf16.msra.mxu0 %v2248
        %2372 = vmatprep.subr.bf16.mxu0 0
        %2373 = vmatpush1.bf16.msra.mxu0 %v2247
        %2374 = vmatprep.subr.bf16.mxu0 0
        %2375 = vmatpush1.bf16.msra.mxu0 %v2246
        %2376 = vmatprep.subr.bf16.mxu0 0
        %2377 = vmatpush1.bf16.msra.mxu0 %v2245
        %2378 = vmatprep.subr.bf16.mxu0 0
        %2379 = vmatpush1.bf16.msra.mxu0 %v2244
        %2380 = vmatprep.subr.bf16.mxu0 0
        %2381 = vmatpush1.bf16.msra.mxu0 %v2243
        %2382 = vmatprep.subr.bf16.mxu0 0
        %2383 = vmatpush1.bf16.msra.mxu0 %v2242
        %2384 = vmatprep.subr.bf16.mxu0 0
        %2385 = vmatpush1.bf16.msra.mxu0 %v2241
        %2386 = vmatprep.subr.bf16.mxu0 0
        %2387 = vmatpush2.bf16.msra.mxu0 0
        %2388 = vmatprep.subr.bf16.mxu0 0
        %2389 = vmatpush2.bf16.msra.mxu0 0
        %2390 = vmatprep.subr.bf16.mxu0 0
        %2391 = vmatpush2.bf16.msra.mxu0 0
        %2392 = vmatprep.subr.bf16.mxu0 0
        %2393 = vmatpush2.bf16.msra.mxu0 0
        %2394 = vmatprep.subr.bf16.mxu0 0
        %2395 = vmatpush2.bf16.msra.mxu0 0
        %2396 = vmatprep.subr.bf16.mxu0 0
        %2397 = vmatpush2.bf16.msra.mxu0 0
        %2398 = vmatprep.subr.bf16.mxu0 0
        %2399 = vmatpush2.bf16.msra.mxu0 0
        %2400 = vmatprep.subr.bf16.mxu0 0
        %2401 = vmatpush2.bf16.msra.mxu0 0
        %2402 = vmatprep.mubr.bf16.mxu0 0
        %2403 = vmatmul.mubr.bf16.gmra.mxu0 %v2023
        %v2404 = vpop.f32.mrf.mxu0
        %v2405 = vadd.f32 %v2308, %v2404
        %v2406 = vpop.f32.mrf.mxu0
        %v2407 = vpop.f32.mrf.mxu0
        %v2408 = vadd.f32 %v2311, %v2407
        %v2409 = vpop.f32.mrf.mxu0
        %2410 = vmatprep.mubr.bf16.mxu0 0
        %2411 = vmatmul.mubr.bf16.gmra.mxu0 %v2024
        %v2412 = vpop.f32.mrf.mxu0
        %v2413 = vadd.f32 %v2316, %v2412
        %v2414 = vpop.f32.mrf.mxu0
        %v2415 = vpop.f32.mrf.mxu0
        %v2416 = vadd.f32 %v2319, %v2415
        %v2417 = vpop.f32.mrf.mxu0
        %2418 = vmatprep.mubr.bf16.mxu0 0
        %2419 = vmatmul.mubr.bf16.gmra.mxu0 %v2025
        %v2420 = vpop.f32.mrf.mxu0
        %v2421 = vadd.f32 %v2324, %v2420
        %v2422 = vpop.f32.mrf.mxu0
        %v2423 = vpop.f32.mrf.mxu0
        %v2424 = vadd.f32 %v2327, %v2423
        %v2425 = vpop.f32.mrf.mxu0
        %2426 = vmatprep.mubr.bf16.mxu0 0
        %2427 = vmatmul.mubr.bf16.gmra.mxu0 %v2026
        %v2428 = vpop.f32.mrf.mxu0
        %v2429 = vadd.f32 %v2332, %v2428
        %v2430 = vpop.f32.mrf.mxu0
        %v2431 = vpop.f32.mrf.mxu0
        %v2432 = vadd.f32 %v2335, %v2431
        %v2433 = vpop.f32.mrf.mxu0
        %2434 = vmatprep.mubr.bf16.mxu0 0
        %2435 = vmatmul.mubr.bf16.gmra.mxu0 %v2027
        %v2436 = vpop.f32.mrf.mxu0
        %v2437 = vadd.f32 %v2340, %v2436
        %v2438 = vpop.f32.mrf.mxu0
        %v2439 = vpop.f32.mrf.mxu0
        %v2440 = vadd.f32 %v2343, %v2439
        %v2441 = vpop.f32.mrf.mxu0
        %2442 = vmatprep.mubr.bf16.mxu0 0
        %2443 = vmatmul.mubr.bf16.gmra.mxu0 %v2028
        %v2444 = vpop.f32.mrf.mxu0
        %v2445 = vadd.f32 %v2348, %v2444
        %v2446 = vpop.f32.mrf.mxu0
        %v2447 = vpop.f32.mrf.mxu0
        %v2448 = vadd.f32 %v2351, %v2447
        %v2449 = vpop.f32.mrf.mxu0
        %2450 = vmatprep.mubr.bf16.mxu0 0
        %2451 = vmatmul.mubr.bf16.gmra.mxu0 %v2029
        %v2452 = vpop.f32.mrf.mxu0
        %v2453 = vadd.f32 %v2356, %v2452
        %v2454 = vpop.f32.mrf.mxu0
        %v2455 = vpop.f32.mrf.mxu0
        %v2456 = vadd.f32 %v2359, %v2455
        %v2457 = vpop.f32.mrf.mxu0
        %2458 = vmatprep.mubr.bf16.mxu0 0
        %2459 = vmatmul.mubr.bf16.gmra.mxu0 %v2030
        %v2460 = vpop.f32.mrf.mxu0
        %v2461 = vadd.f32 %v2364, %v2460
        %v2462 = vpop.f32.mrf.mxu0
        %v2463 = vpop.f32.mrf.mxu0
        %v2464 = vadd.f32 %v2367, %v2463
        %v2465 = vpop.f32.mrf.mxu0
        %2466 = vdwg.mxu0
        %v2515 = vunpack.c.l.b16 %v2032
        %v2516 = vunpack.c.l.b16 %v2033
        %v2517 = vunpack.c.l.b16 %v2034
        %v2518 = vunpack.c.l.b16 %v2035
        %v2519 = vunpack.c.l.b16 %v2036
        %v2520 = vunpack.c.l.b16 %v2037
        %v2521 = vunpack.c.l.b16 %v2038
        %v2522 = vunpack.c.l.b16 %v2039
        %v2523 = vunpack.c.l.b16 %v2040
        %v2524 = vunpack.c.l.b16 %v2041
        %v2525 = vunpack.c.l.b16 %v2042
        %v2526 = vunpack.c.l.b16 %v2043
        %v2527 = vunpack.c.l.b16 %v2044
        %v2528 = vunpack.c.l.b16 %v2045
        %v2529 = vunpack.c.l.b16 %v2046
        %v2530 = vunpack.c.l.b16 %v2047
        %v2531 = vunpack.c.l.b16 %v2048
        %v2532 = vunpack.c.l.b16 %v2049
        %v2533 = vunpack.c.l.b16 %v2050
        %v2534 = vunpack.c.l.b16 %v2051
        %v2535 = vunpack.c.l.b16 %v2052
        %v2536 = vunpack.c.l.b16 %v2053
        %v2537 = vunpack.c.l.b16 %v2054
        %v2538 = vunpack.c.l.b16 %v2055
        %v2539 = vunpack.c.l.b16 %v2056
        %v2540 = vunpack.c.l.b16 %v2057
        %v2541 = vunpack.c.l.b16 %v2058
        %v2542 = vunpack.c.l.b16 %v2059
        %v2543 = vunpack.c.l.b16 %v2060
        %v2544 = vunpack.c.l.b16 %v2061
        %v2545 = vunpack.c.l.b16 %v2062
        %v2546 = vunpack.c.l.b16 %v2063
        %v2547 = vunpack.c.l.b16 %v2064
        %v2548 = vunpack.c.l.b16 %v2065
        %v2549 = vunpack.c.l.b16 %v2066
        %v2550 = vunpack.c.l.b16 %v2067
        %v2551 = vunpack.c.l.b16 %v2068
        %v2552 = vunpack.c.l.b16 %v2069
        %v2553 = vunpack.c.l.b16 %v2070
        %v2554 = vunpack.c.l.b16 %v2071
        %v2555 = vunpack.c.l.b16 %v2072
        %v2556 = vunpack.c.l.b16 %v2073
        %v2557 = vunpack.c.l.b16 %v2074
        %v2558 = vunpack.c.l.b16 %v2075
        %v2559 = vunpack.c.l.b16 %v2076
        %v2560 = vunpack.c.l.b16 %v2077
        %v2561 = vunpack.c.l.b16 %v2078
        %v2562 = vunpack.c.l.b16 %v2079
        %v2563 = vpack.c.b16 %v2516, %v2515
        %v2564 = vpack.c.b16 %v2518, %v2517
        %v2565 = vpack.c.b16 %v2520, %v2519
        %v2566 = vpack.c.b16 %v2522, %v2521
        %v2567 = vpack.c.b16 %v2524, %v2523
        %v2568 = vpack.c.b16 %v2526, %v2525
        %v2569 = vpack.c.b16 %v2528, %v2527
        %v2570 = vpack.c.b16 %v2530, %v2529
        %v2571 = vpack.c.b16 %v2532, %v2531
        %v2572 = vpack.c.b16 %v2534, %v2533
        %v2573 = vpack.c.b16 %v2536, %v2535
        %v2574 = vpack.c.b16 %v2538, %v2537
        %v2575 = vpack.c.b16 %v2540, %v2539
        %v2576 = vpack.c.b16 %v2542, %v2541
        %v2577 = vpack.c.b16 %v2544, %v2543
        %v2578 = vpack.c.b16 %v2546, %v2545
        %v2579 = vpack.c.b16 %v2548, %v2547
        %v2580 = vpack.c.b16 %v2550, %v2549
        %v2581 = vpack.c.b16 %v2552, %v2551
        %v2582 = vpack.c.b16 %v2554, %v2553
        %v2583 = vpack.c.b16 %v2556, %v2555
        %v2584 = vpack.c.b16 %v2558, %v2557
        %v2585 = vpack.c.b16 %v2560, %v2559
        %v2586 = vpack.c.b16 %v2562, %v2561
        %2611 = vmatprep.subr.bf16.mxu0 0
        %2612 = vmatpush1.bf16.msra.mxu0 %v2570
        %2613 = vmatprep.subr.bf16.mxu0 0
        %2614 = vmatpush1.bf16.msra.mxu0 %v2569
        %2615 = vmatprep.subr.bf16.mxu0 0
        %2616 = vmatpush1.bf16.msra.mxu0 %v2568
        %2617 = vmatprep.subr.bf16.mxu0 0
        %2618 = vmatpush1.bf16.msra.mxu0 %v2567
        %2619 = vmatprep.subr.bf16.mxu0 0
        %2620 = vmatpush1.bf16.msra.mxu0 %v2566
        %2621 = vmatprep.subr.bf16.mxu0 0
        %2622 = vmatpush1.bf16.msra.mxu0 %v2565
        %2623 = vmatprep.subr.bf16.mxu0 0
        %2624 = vmatpush1.bf16.msra.mxu0 %v2564
        %2625 = vmatprep.subr.bf16.mxu0 0
        %2626 = vmatpush1.bf16.msra.mxu0 %v2563
        %2627 = vmatprep.subr.bf16.mxu0 0
        %2628 = vmatpush2.bf16.msra.mxu0 %v2578
        %2629 = vmatprep.subr.bf16.mxu0 0
        %2630 = vmatpush2.bf16.msra.mxu0 %v2577
        %2631 = vmatprep.subr.bf16.mxu0 0
        %2632 = vmatpush2.bf16.msra.mxu0 %v2576
        %2633 = vmatprep.subr.bf16.mxu0 0
        %2634 = vmatpush2.bf16.msra.mxu0 %v2575
        %2635 = vmatprep.subr.bf16.mxu0 0
        %2636 = vmatpush2.bf16.msra.mxu0 %v2574
        %2637 = vmatprep.subr.bf16.mxu0 0
        %2638 = vmatpush2.bf16.msra.mxu0 %v2573
        %2639 = vmatprep.subr.bf16.mxu0 0
        %2640 = vmatpush2.bf16.msra.mxu0 %v2572
        %2641 = vmatprep.subr.bf16.mxu0 0
        %2642 = vmatpush2.bf16.msra.mxu0 %v2571
        %2643 = vmatprep.mubr.bf16.mxu0 %v1887
        %2644 = vmatmul.mubr.bf16.gmra.mxu0 %v1980
        %v2645 = vpop.f32.mrf.mxu0
        %v2646 = vadd.f32 %v2405, %v2645
        %v2647 = vpop.f32.mrf.mxu0
        %v2648 = vpop.f32.mrf.mxu0
        %v2649 = vadd.f32 %v2408, %v2648
        %v2650 = vpop.f32.mrf.mxu0
        %2651 = vmatprep.mubr.bf16.mxu0 %v1888
        %2652 = vmatmul.mubr.bf16.gmra.mxu0 %v1981
        %v2653 = vpop.f32.mrf.mxu0
        %v2654 = vadd.f32 %v2413, %v2653
        %v2655 = vpop.f32.mrf.mxu0
        %v2656 = vpop.f32.mrf.mxu0
        %v2657 = vadd.f32 %v2416, %v2656
        %v2658 = vpop.f32.mrf.mxu0
        %2659 = vmatprep.mubr.bf16.mxu0 %v1889
        %2660 = vmatmul.mubr.bf16.gmra.mxu0 %v1982
        %v2661 = vpop.f32.mrf.mxu0
        %v2662 = vadd.f32 %v2421, %v2661
        %v2663 = vpop.f32.mrf.mxu0
        %v2664 = vpop.f32.mrf.mxu0
        %v2665 = vadd.f32 %v2424, %v2664
        %v2666 = vpop.f32.mrf.mxu0
        %2667 = vmatprep.mubr.bf16.mxu0 %v1890
        %2668 = vmatmul.mubr.bf16.gmra.mxu0 %v1983
        %v2669 = vpop.f32.mrf.mxu0
        %v2670 = vadd.f32 %v2429, %v2669
        %v2671 = vpop.f32.mrf.mxu0
        %v2672 = vpop.f32.mrf.mxu0
        %v2673 = vadd.f32 %v2432, %v2672
        %v2674 = vpop.f32.mrf.mxu0
        %2675 = vmatprep.mubr.bf16.mxu0 %v1891
        %2676 = vmatmul.mubr.bf16.gmra.mxu0 %v1984
        %v2677 = vpop.f32.mrf.mxu0
        %v2678 = vadd.f32 %v2437, %v2677
        %v2679 = vpop.f32.mrf.mxu0
        %v2680 = vpop.f32.mrf.mxu0
        %v2681 = vadd.f32 %v2440, %v2680
        %v2682 = vpop.f32.mrf.mxu0
        %2683 = vmatprep.mubr.bf16.mxu0 %v1892
        %2684 = vmatmul.mubr.bf16.gmra.mxu0 %v1985
        %v2685 = vpop.f32.mrf.mxu0
        %v2686 = vadd.f32 %v2445, %v2685
        %v2687 = vpop.f32.mrf.mxu0
        %v2688 = vpop.f32.mrf.mxu0
        %v2689 = vadd.f32 %v2448, %v2688
        %v2690 = vpop.f32.mrf.mxu0
        %2691 = vmatprep.mubr.bf16.mxu0 %v1893
        %2692 = vmatmul.mubr.bf16.gmra.mxu0 %v1986
        %v2693 = vpop.f32.mrf.mxu0
        %v2694 = vadd.f32 %v2453, %v2693
        %v2695 = vpop.f32.mrf.mxu0
        %v2696 = vpop.f32.mrf.mxu0
        %v2697 = vadd.f32 %v2456, %v2696
        %v2698 = vpop.f32.mrf.mxu0
        %2699 = vmatprep.mubr.bf16.mxu0 %v1894
        %2700 = vmatmul.mubr.bf16.gmra.mxu0 %v1987
        %v2701 = vpop.f32.mrf.mxu0
        %v2702 = vadd.f32 %v2461, %v2701
        %v2703 = vpop.f32.mrf.mxu0
        %v2704 = vpop.f32.mrf.mxu0
        %v2705 = vadd.f32 %v2464, %v2704
        %v2706 = vpop.f32.mrf.mxu0
        %2707 = vdwg.mxu0
        %2708 = vmatprep.subr.bf16.mxu0 0
        %2709 = vmatpush1.bf16.msra.mxu0 %v2586
        %2710 = vmatprep.subr.bf16.mxu0 0
        %2711 = vmatpush1.bf16.msra.mxu0 %v2585
        %2712 = vmatprep.subr.bf16.mxu0 0
        %2713 = vmatpush1.bf16.msra.mxu0 %v2584
        %2714 = vmatprep.subr.bf16.mxu0 0
        %2715 = vmatpush1.bf16.msra.mxu0 %v2583
        %2716 = vmatprep.subr.bf16.mxu0 0
        %2717 = vmatpush1.bf16.msra.mxu0 %v2582
        %2718 = vmatprep.subr.bf16.mxu0 0
        %2719 = vmatpush1.bf16.msra.mxu0 %v2581
        %2720 = vmatprep.subr.bf16.mxu0 0
        %2721 = vmatpush1.bf16.msra.mxu0 %v2580
        %2722 = vmatprep.subr.bf16.mxu0 0
        %2723 = vmatpush1.bf16.msra.mxu0 %v2579
        %2724 = vmatprep.subr.bf16.mxu0 0
        %2725 = vmatpush2.bf16.msra.mxu0 0
        %2726 = vmatprep.subr.bf16.mxu0 0
        %2727 = vmatpush2.bf16.msra.mxu0 0
        %2728 = vmatprep.subr.bf16.mxu0 0
        %2729 = vmatpush2.bf16.msra.mxu0 0
        %2730 = vmatprep.subr.bf16.mxu0 0
        %2731 = vmatpush2.bf16.msra.mxu0 0
        %2732 = vmatprep.subr.bf16.mxu0 0
        %2733 = vmatpush2.bf16.msra.mxu0 0
        %2734 = vmatprep.subr.bf16.mxu0 0
        %2735 = vmatpush2.bf16.msra.mxu0 0
        %2736 = vmatprep.subr.bf16.mxu0 0
        %2737 = vmatpush2.bf16.msra.mxu0 0
        %2738 = vmatprep.subr.bf16.mxu0 0
        %2739 = vmatpush2.bf16.msra.mxu0 0
        %2740 = vmatprep.mubr.bf16.mxu0 0
        %2741 = vmatmul.mubr.bf16.gmra.mxu0 %v2022
        %v2742 = vpop.f32.mrf.mxu0
        %v2743 = vadd.f32 %v2646, %v2742
        %v2744 = vpop.f32.mrf.mxu0
        %v2745 = vpop.f32.mrf.mxu0
        %v2746 = vadd.f32 %v2649, %v2745
        %v2747 = vpop.f32.mrf.mxu0
        %2748 = vmatprep.mubr.bf16.mxu0 0
        %2749 = vmatmul.mubr.bf16.gmra.mxu0 %v2023
        %v2750 = vpop.f32.mrf.mxu0
        %v2751 = vadd.f32 %v2654, %v2750
        %v2752 = vpop.f32.mrf.mxu0
        %v2753 = vpop.f32.mrf.mxu0
        %v2754 = vadd.f32 %v2657, %v2753
        %v2755 = vpop.f32.mrf.mxu0
        %2756 = vmatprep.mubr.bf16.mxu0 0
        %2757 = vmatmul.mubr.bf16.gmra.mxu0 %v2024
        %v2758 = vpop.f32.mrf.mxu0
        %v2759 = vadd.f32 %v2662, %v2758
        %v2760 = vpop.f32.mrf.mxu0
        %v2761 = vpop.f32.mrf.mxu0
        %v2762 = vadd.f32 %v2665, %v2761
        %v2763 = vpop.f32.mrf.mxu0
        %2764 = vmatprep.mubr.bf16.mxu0 0
        %2765 = vmatmul.mubr.bf16.gmra.mxu0 %v2025
        %v2766 = vpop.f32.mrf.mxu0
        %v2767 = vadd.f32 %v2670, %v2766
        %v2768 = vpop.f32.mrf.mxu0
        %v2769 = vpop.f32.mrf.mxu0
        %v2770 = vadd.f32 %v2673, %v2769
        %v2771 = vpop.f32.mrf.mxu0
        %2772 = vmatprep.mubr.bf16.mxu0 0
        %2773 = vmatmul.mubr.bf16.gmra.mxu0 %v2026
        %v2774 = vpop.f32.mrf.mxu0
        %v2775 = vadd.f32 %v2678, %v2774
        %v2776 = vpop.f32.mrf.mxu0
        %v2777 = vpop.f32.mrf.mxu0
        %v2778 = vadd.f32 %v2681, %v2777
        %v2779 = vpop.f32.mrf.mxu0
        %2780 = vmatprep.mubr.bf16.mxu0 0
        %2781 = vmatmul.mubr.bf16.gmra.mxu0 %v2027
        %v2782 = vpop.f32.mrf.mxu0
        %v2783 = vadd.f32 %v2686, %v2782
        %v2784 = vpop.f32.mrf.mxu0
        %v2785 = vpop.f32.mrf.mxu0
        %v2786 = vadd.f32 %v2689, %v2785
        %v2787 = vpop.f32.mrf.mxu0
        %2788 = vmatprep.mubr.bf16.mxu0 0
        %2789 = vmatmul.mubr.bf16.gmra.mxu0 %v2028
        %v2790 = vpop.f32.mrf.mxu0
        %v2791 = vadd.f32 %v2694, %v2790
        %v2792 = vpop.f32.mrf.mxu0
        %v2793 = vpop.f32.mrf.mxu0
        %v2794 = vadd.f32 %v2697, %v2793
        %v2795 = vpop.f32.mrf.mxu0
        %2796 = vmatprep.mubr.bf16.mxu0 0
        %2797 = vmatmul.mubr.bf16.gmra.mxu0 %v2029
        %v2798 = vpop.f32.mrf.mxu0
        %v2799 = vadd.f32 %v2702, %v2798
        %v2800 = vpop.f32.mrf.mxu0
        %v2801 = vpop.f32.mrf.mxu0
        %v2802 = vadd.f32 %v2705, %v2801
        %v2803 = vpop.f32.mrf.mxu0
        %2804 = vdwg.mxu0
        %s2805 = scalar_lea.vmem %s3, 384
        %v2806 = vld [vmem:[%s2805] sm:$0xf]
        %v2807 = vld [vmem:[%s2805 + $0x4] sm:$0xf]
        %v2808 = vld [vmem:[%s2805 + $0x8] sm:$0xf]
        %v2809 = vld [vmem:[%s2805 + $0xc] sm:$0xf]
        %v2810 = vld [vmem:[%s2805 + $0x10] sm:$0xf]
        %v2811 = vld [vmem:[%s2805 + $0x14] sm:$0xf]
        %v2812 = vld [vmem:[%s2805 + $0x18] sm:$0xf]
        %v2813 = vld [vmem:[%s2805 + $0x1c] sm:$0xf]
        %v2814 = vld [vmem:[%s2805 + $0x20] sm:$0xf]
        %v2815 = vld [vmem:[%s2805 + $0x24] sm:$0xf]
        %v2816 = vld [vmem:[%s2805 + $0x28] sm:$0xf]
        %v2817 = vld [vmem:[%s2805 + $0x2c] sm:$0xf]
        %v2818 = vld [vmem:[%s2805 + $0x30] sm:$0xf]
        %v2819 = vld [vmem:[%s2805 + $0x34] sm:$0xf]
        %v2820 = vld [vmem:[%s2805 + $0x38] sm:$0xf]
        %v2821 = vld [vmem:[%s2805 + $0x3c] sm:$0xf]
        %v2822 = vld [vmem:[%s2805 + $0x40] sm:$0xf]
        %v2823 = vld [vmem:[%s2805 + $0x44] sm:$0xf]
        %v2824 = vld [vmem:[%s2805 + $0x48] sm:$0xf]
        %v2825 = vld [vmem:[%s2805 + $0x4c] sm:$0xf]
        %v2826 = vld [vmem:[%s2805 + $0x50] sm:$0xf]
        %v2827 = vld [vmem:[%s2805 + $0x54] sm:$0xf]
        %v2828 = vld [vmem:[%s2805 + $0x58] sm:$0xf]
        %v2829 = vld [vmem:[%s2805 + $0x5c] sm:$0xf]
        %v2830 = vld [vmem:[%s2805 + $0x60] sm:$0xf]
        %v2831 = vld [vmem:[%s2805 + $0x64] sm:$0xf]
        %v2832 = vld [vmem:[%s2805 + $0x68] sm:$0xf]
        %v2833 = vld [vmem:[%s2805 + $0x6c] sm:$0xf]
        %v2834 = vld [vmem:[%s2805 + $0x70] sm:$0xf]
        %v2835 = vld [vmem:[%s2805 + $0x74] sm:$0xf]
        %v2836 = vld [vmem:[%s2805 + $0x78] sm:$0xf]
        %v2837 = vld [vmem:[%s2805 + $0x7c] sm:$0xf]
        %v2838 = vld [vmem:[%s2805 + $0x80] sm:$0xf]
        %v2839 = vld [vmem:[%s2805 + $0x84] sm:$0xf]
        %v2840 = vld [vmem:[%s2805 + $0x88] sm:$0xf]
        %v2841 = vld [vmem:[%s2805 + $0x8c] sm:$0xf]
        %v2842 = vld [vmem:[%s2805 + $0x90] sm:$0xf]
        %v2843 = vld [vmem:[%s2805 + $0x94] sm:$0xf]
        %v2844 = vld [vmem:[%s2805 + $0x98] sm:$0xf]
        %v2845 = vld [vmem:[%s2805 + $0x9c] sm:$0xf]
        %v2846 = vld [vmem:[%s2805 + $0xa0] sm:$0xf]
        %v2847 = vld [vmem:[%s2805 + $0xa4] sm:$0xf]
        %v2848 = vld [vmem:[%s2805 + $0xa8] sm:$0xf]
        %v2849 = vld [vmem:[%s2805 + $0xac] sm:$0xf]
        %v2850 = vld [vmem:[%s2805 + $0xb0] sm:$0xf]
        %v2851 = vld [vmem:[%s2805 + $0xb4] sm:$0xf]
        %v2852 = vld [vmem:[%s2805 + $0xb8] sm:$0xf]
        %v2853 = vld [vmem:[%s2805 + $0xbc] sm:$0xf]
        %v2902 = vunpack.c.l.b16 %v2806
        %v2903 = vunpack.c.l.b16 %v2807
        %v2904 = vunpack.c.l.b16 %v2808
        %v2905 = vunpack.c.l.b16 %v2809
        %v2906 = vunpack.c.l.b16 %v2810
        %v2907 = vunpack.c.l.b16 %v2811
        %v2908 = vunpack.c.l.b16 %v2812
        %v2909 = vunpack.c.l.b16 %v2813
        %v2910 = vunpack.c.l.b16 %v2814
        %v2911 = vunpack.c.l.b16 %v2815
        %v2912 = vunpack.c.l.b16 %v2816
        %v2913 = vunpack.c.l.b16 %v2817
        %v2914 = vunpack.c.l.b16 %v2818
        %v2915 = vunpack.c.l.b16 %v2819
        %v2916 = vunpack.c.l.b16 %v2820
        %v2917 = vunpack.c.l.b16 %v2821
        %v2918 = vunpack.c.l.b16 %v2822
        %v2919 = vunpack.c.l.b16 %v2823
        %v2920 = vunpack.c.l.b16 %v2824
        %v2921 = vunpack.c.l.b16 %v2825
        %v2922 = vunpack.c.l.b16 %v2826
        %v2923 = vunpack.c.l.b16 %v2827
        %v2924 = vunpack.c.l.b16 %v2828
        %v2925 = vunpack.c.l.b16 %v2829
        %v2926 = vunpack.c.l.b16 %v2830
        %v2927 = vunpack.c.l.b16 %v2831
        %v2928 = vunpack.c.l.b16 %v2832
        %v2929 = vunpack.c.l.b16 %v2833
        %v2930 = vunpack.c.l.b16 %v2834
        %v2931 = vunpack.c.l.b16 %v2835
        %v2932 = vunpack.c.l.b16 %v2836
        %v2933 = vunpack.c.l.b16 %v2837
        %v2934 = vunpack.c.l.b16 %v2838
        %v2935 = vunpack.c.l.b16 %v2839
        %v2936 = vunpack.c.l.b16 %v2840
        %v2937 = vunpack.c.l.b16 %v2841
        %v2938 = vunpack.c.l.b16 %v2842
        %v2939 = vunpack.c.l.b16 %v2843
        %v2940 = vunpack.c.l.b16 %v2844
        %v2941 = vunpack.c.l.b16 %v2845
        %v2942 = vunpack.c.l.b16 %v2846
        %v2943 = vunpack.c.l.b16 %v2847
        %v2944 = vunpack.c.l.b16 %v2848
        %v2945 = vunpack.c.l.b16 %v2849
        %v2946 = vunpack.c.l.b16 %v2850
        %v2947 = vunpack.c.l.b16 %v2851
        %v2948 = vunpack.c.l.b16 %v2852
        %v2949 = vunpack.c.l.b16 %v2853
        %v2950 = vpack.c.b16 %v2903, %v2902
        %v2951 = vpack.c.b16 %v2905, %v2904
        %v2952 = vpack.c.b16 %v2907, %v2906
        %v2953 = vpack.c.b16 %v2909, %v2908
        %v2954 = vpack.c.b16 %v2911, %v2910
        %v2955 = vpack.c.b16 %v2913, %v2912
        %v2956 = vpack.c.b16 %v2915, %v2914
        %v2957 = vpack.c.b16 %v2917, %v2916
        %v2958 = vpack.c.b16 %v2919, %v2918
        %v2959 = vpack.c.b16 %v2921, %v2920
        %v2960 = vpack.c.b16 %v2923, %v2922
        %v2961 = vpack.c.b16 %v2925, %v2924
        %v2962 = vpack.c.b16 %v2927, %v2926
        %v2963 = vpack.c.b16 %v2929, %v2928
        %v2964 = vpack.c.b16 %v2931, %v2930
        %v2965 = vpack.c.b16 %v2933, %v2932
        %v2966 = vpack.c.b16 %v2935, %v2934
        %v2967 = vpack.c.b16 %v2937, %v2936
        %v2968 = vpack.c.b16 %v2939, %v2938
        %v2969 = vpack.c.b16 %v2941, %v2940
        %v2970 = vpack.c.b16 %v2943, %v2942
        %v2971 = vpack.c.b16 %v2945, %v2944
        %v2972 = vpack.c.b16 %v2947, %v2946
        %v2973 = vpack.c.b16 %v2949, %v2948
        %2998 = vmatprep.subr.bf16.mxu0 0
        %2999 = vmatpush1.bf16.msra.mxu0 %v2957
        %3000 = vmatprep.subr.bf16.mxu0 0
        %3001 = vmatpush1.bf16.msra.mxu0 %v2956
        %3002 = vmatprep.subr.bf16.mxu0 0
        %3003 = vmatpush1.bf16.msra.mxu0 %v2955
        %3004 = vmatprep.subr.bf16.mxu0 0
        %3005 = vmatpush1.bf16.msra.mxu0 %v2954
        %3006 = vmatprep.subr.bf16.mxu0 0
        %3007 = vmatpush1.bf16.msra.mxu0 %v2953
        %3008 = vmatprep.subr.bf16.mxu0 0
        %3009 = vmatpush1.bf16.msra.mxu0 %v2952
        %3010 = vmatprep.subr.bf16.mxu0 0
        %3011 = vmatpush1.bf16.msra.mxu0 %v2951
        %3012 = vmatprep.subr.bf16.mxu0 0
        %3013 = vmatpush1.bf16.msra.mxu0 %v2950
        %3014 = vmatprep.subr.bf16.mxu0 0
        %3015 = vmatpush2.bf16.msra.mxu0 %v2965
        %3016 = vmatprep.subr.bf16.mxu0 0
        %3017 = vmatpush2.bf16.msra.mxu0 %v2964
        %3018 = vmatprep.subr.bf16.mxu0 0
        %3019 = vmatpush2.bf16.msra.mxu0 %v2963
        %3020 = vmatprep.subr.bf16.mxu0 0
        %3021 = vmatpush2.bf16.msra.mxu0 %v2962
        %3022 = vmatprep.subr.bf16.mxu0 0
        %3023 = vmatpush2.bf16.msra.mxu0 %v2961
        %3024 = vmatprep.subr.bf16.mxu0 0
        %3025 = vmatpush2.bf16.msra.mxu0 %v2960
        %3026 = vmatprep.subr.bf16.mxu0 0
        %3027 = vmatpush2.bf16.msra.mxu0 %v2959
        %3028 = vmatprep.subr.bf16.mxu0 0
        %3029 = vmatpush2.bf16.msra.mxu0 %v2958
        %3030 = vmatprep.mubr.bf16.mxu0 %v1889
        %3031 = vmatmul.mubr.bf16.gmra.mxu0 %v1982
        %v3032 = vpop.f32.mrf.mxu0
        %v3033 = vadd.f32 0.0, %v3032
        %v3034 = vpop.f32.mrf.mxu0
        %v3035 = vpop.f32.mrf.mxu0
        %v3036 = vadd.f32 0.0, %v3035
        %v3037 = vpop.f32.mrf.mxu0
        %3038 = vmatprep.mubr.bf16.mxu0 %v1890
        %3039 = vmatmul.mubr.bf16.gmra.mxu0 %v1983
        %v3040 = vpop.f32.mrf.mxu0
        %v3041 = vadd.f32 0.0, %v3040
        %v3042 = vpop.f32.mrf.mxu0
        %v3043 = vpop.f32.mrf.mxu0
        %v3044 = vadd.f32 0.0, %v3043
        %v3045 = vpop.f32.mrf.mxu0
        %3046 = vmatprep.mubr.bf16.mxu0 %v1891
        %3047 = vmatmul.mubr.bf16.gmra.mxu0 %v1984
        %v3048 = vpop.f32.mrf.mxu0
        %v3049 = vadd.f32 0.0, %v3048
        %v3050 = vpop.f32.mrf.mxu0
        %v3051 = vpop.f32.mrf.mxu0
        %v3052 = vadd.f32 0.0, %v3051
        %v3053 = vpop.f32.mrf.mxu0
        %3054 = vmatprep.mubr.bf16.mxu0 %v1892
        %3055 = vmatmul.mubr.bf16.gmra.mxu0 %v1985
        %v3056 = vpop.f32.mrf.mxu0
        %v3057 = vadd.f32 0.0, %v3056
        %v3058 = vpop.f32.mrf.mxu0
        %v3059 = vpop.f32.mrf.mxu0
        %v3060 = vadd.f32 0.0, %v3059
        %v3061 = vpop.f32.mrf.mxu0
        %3062 = vmatprep.mubr.bf16.mxu0 %v1893
        %3063 = vmatmul.mubr.bf16.gmra.mxu0 %v1986
        %v3064 = vpop.f32.mrf.mxu0
        %v3065 = vadd.f32 0.0, %v3064
        %v3066 = vpop.f32.mrf.mxu0
        %v3067 = vpop.f32.mrf.mxu0
        %v3068 = vadd.f32 0.0, %v3067
        %v3069 = vpop.f32.mrf.mxu0
        %3070 = vmatprep.mubr.bf16.mxu0 %v1894
        %3071 = vmatmul.mubr.bf16.gmra.mxu0 %v1987
        %v3072 = vpop.f32.mrf.mxu0
        %v3073 = vadd.f32 0.0, %v3072
        %v3074 = vpop.f32.mrf.mxu0
        %v3075 = vpop.f32.mrf.mxu0
        %v3076 = vadd.f32 0.0, %v3075
        %v3077 = vpop.f32.mrf.mxu0
        %3078 = vmatprep.mubr.bf16.mxu0 %v1895
        %3079 = vmatmul.mubr.bf16.gmra.mxu0 %v1988
        %v3080 = vpop.f32.mrf.mxu0
        %v3081 = vadd.f32 0.0, %v3080
        %v3082 = vpop.f32.mrf.mxu0
        %v3083 = vpop.f32.mrf.mxu0
        %v3084 = vadd.f32 0.0, %v3083
        %v3085 = vpop.f32.mrf.mxu0
        %3086 = vmatprep.mubr.bf16.mxu0 %v1896
        %3087 = vmatmul.mubr.bf16.gmra.mxu0 %v1989
        %v3088 = vpop.f32.mrf.mxu0
        %v3089 = vadd.f32 0.0, %v3088
        %v3090 = vpop.f32.mrf.mxu0
        %v3091 = vpop.f32.mrf.mxu0
        %v3092 = vadd.f32 0.0, %v3091
        %v3093 = vpop.f32.mrf.mxu0
        %3094 = vdwg.mxu0
        %3095 = vmatprep.subr.bf16.mxu0 0
        %3096 = vmatpush1.bf16.msra.mxu0 %v2973
        %3097 = vmatprep.subr.bf16.mxu0 0
        %3098 = vmatpush1.bf16.msra.mxu0 %v2972
        %3099 = vmatprep.subr.bf16.mxu0 0
        %3100 = vmatpush1.bf16.msra.mxu0 %v2971
        %3101 = vmatprep.subr.bf16.mxu0 0
        %3102 = vmatpush1.bf16.msra.mxu0 %v2970
        %3103 = vmatprep.subr.bf16.mxu0 0
        %3104 = vmatpush1.bf16.msra.mxu0 %v2969
        %3105 = vmatprep.subr.bf16.mxu0 0
        %3106 = vmatpush1.bf16.msra.mxu0 %v2968
        %3107 = vmatprep.subr.bf16.mxu0 0
        %3108 = vmatpush1.bf16.msra.mxu0 %v2967
        %3109 = vmatprep.subr.bf16.mxu0 0
        %3110 = vmatpush1.bf16.msra.mxu0 %v2966
        %3111 = vmatprep.subr.bf16.mxu0 0
        %3112 = vmatpush2.bf16.msra.mxu0 0
        %3113 = vmatprep.subr.bf16.mxu0 0
        %3114 = vmatpush2.bf16.msra.mxu0 0
        %3115 = vmatprep.subr.bf16.mxu0 0
        %3116 = vmatpush2.bf16.msra.mxu0 0
        %3117 = vmatprep.subr.bf16.mxu0 0
        %3118 = vmatpush2.bf16.msra.mxu0 0
        %3119 = vmatprep.subr.bf16.mxu0 0
        %3120 = vmatpush2.bf16.msra.mxu0 0
        %3121 = vmatprep.subr.bf16.mxu0 0
        %3122 = vmatpush2.bf16.msra.mxu0 0
        %3123 = vmatprep.subr.bf16.mxu0 0
        %3124 = vmatpush2.bf16.msra.mxu0 0
        %3125 = vmatprep.subr.bf16.mxu0 0
        %3126 = vmatpush2.bf16.msra.mxu0 0
        %3127 = vmatprep.mubr.bf16.mxu0 0
        %3128 = vmatmul.mubr.bf16.gmra.mxu0 %v2024
        %v3129 = vpop.f32.mrf.mxu0
        %v3130 = vadd.f32 %v3033, %v3129
        %v3131 = vpop.f32.mrf.mxu0
        %v3132 = vpop.f32.mrf.mxu0
        %v3133 = vadd.f32 %v3036, %v3132
        %v3134 = vpop.f32.mrf.mxu0
        %3135 = vmatprep.mubr.bf16.mxu0 0
        %3136 = vmatmul.mubr.bf16.gmra.mxu0 %v2025
        %v3137 = vpop.f32.mrf.mxu0
        %v3138 = vadd.f32 %v3041, %v3137
        %v3139 = vpop.f32.mrf.mxu0
        %v3140 = vpop.f32.mrf.mxu0
        %v3141 = vadd.f32 %v3044, %v3140
        %v3142 = vpop.f32.mrf.mxu0
        %3143 = vmatprep.mubr.bf16.mxu0 0
        %3144 = vmatmul.mubr.bf16.gmra.mxu0 %v2026
        %v3145 = vpop.f32.mrf.mxu0
        %v3146 = vadd.f32 %v3049, %v3145
        %v3147 = vpop.f32.mrf.mxu0
        %v3148 = vpop.f32.mrf.mxu0
        %v3149 = vadd.f32 %v3052, %v3148
        %v3150 = vpop.f32.mrf.mxu0
        %3151 = vmatprep.mubr.bf16.mxu0 0
        %3152 = vmatmul.mubr.bf16.gmra.mxu0 %v2027
        %v3153 = vpop.f32.mrf.mxu0
        %v3154 = vadd.f32 %v3057, %v3153
        %v3155 = vpop.f32.mrf.mxu0
        %v3156 = vpop.f32.mrf.mxu0
        %v3157 = vadd.f32 %v3060, %v3156
        %v3158 = vpop.f32.mrf.mxu0
        %3159 = vmatprep.mubr.bf16.mxu0 0
        %3160 = vmatmul.mubr.bf16.gmra.mxu0 %v2028
        %v3161 = vpop.f32.mrf.mxu0
        %v3162 = vadd.f32 %v3065, %v3161
        %v3163 = vpop.f32.mrf.mxu0
        %v3164 = vpop.f32.mrf.mxu0
        %v3165 = vadd.f32 %v3068, %v3164
        %v3166 = vpop.f32.mrf.mxu0
        %3167 = vmatprep.mubr.bf16.mxu0 0
        %3168 = vmatmul.mubr.bf16.gmra.mxu0 %v2029
        %v3169 = vpop.f32.mrf.mxu0
        %v3170 = vadd.f32 %v3073, %v3169
        %v3171 = vpop.f32.mrf.mxu0
        %v3172 = vpop.f32.mrf.mxu0
        %v3173 = vadd.f32 %v3076, %v3172
        %v3174 = vpop.f32.mrf.mxu0
        %3175 = vmatprep.mubr.bf16.mxu0 0
        %3176 = vmatmul.mubr.bf16.gmra.mxu0 %v2030
        %v3177 = vpop.f32.mrf.mxu0
        %v3178 = vadd.f32 %v3081, %v3177
        %v3179 = vpop.f32.mrf.mxu0
        %v3180 = vpop.f32.mrf.mxu0
        %v3181 = vadd.f32 %v3084, %v3180
        %v3182 = vpop.f32.mrf.mxu0
        %3183 = vmatprep.mubr.bf16.mxu0 0
        %3184 = vmatmul.mubr.bf16.gmra.mxu0 %v2031
        %v3185 = vpop.f32.mrf.mxu0
        %v3186 = vadd.f32 %v3089, %v3185
        %v3187 = vpop.f32.mrf.mxu0
        %v3188 = vpop.f32.mrf.mxu0
        %v3189 = vadd.f32 %v3092, %v3188
        %v3190 = vpop.f32.mrf.mxu0
        %3191 = vdwg.mxu0
        %v3192 = vadd.f32 %v2743, %v3130
        %v3193 = vadd.f32 %v2746, %v3133
        %v3194 = vadd.f32 %v2751, %v3138
        %v3195 = vadd.f32 %v2754, %v3141
        %v3196 = vadd.f32 %v2759, %v3146
        %v3197 = vadd.f32 %v2762, %v3149
        %v3198 = vadd.f32 %v2767, %v3154
        %v3199 = vadd.f32 %v2770, %v3157
        %v3200 = vadd.f32 %v2775, %v3162
        %v3201 = vadd.f32 %v2778, %v3165
        %v3202 = vadd.f32 %v2783, %v3170
        %v3203 = vadd.f32 %v2786, %v3173
        %v3204 = vadd.f32 %v2791, %v3178
        %v3205 = vadd.f32 %v2794, %v3181
        %v3206 = vadd.f32 %v2799, %v3186
        %v3207 = vadd.f32 %v2802, %v3189
        %vm3232 = vcmask 1046528
        %v3233 = vrot.slane %v248, 1
        %v3234 = vrot.slane %v249, 1
        %v3235 = vsel %vm3232, %v3233, %v3234
        %v3236 = vrot.slane %v250, 1
        %v3237 = vsel %vm3232, %v3234, %v3236
        %v3238 = vrot.slane %v251, 1
        %v3239 = vrot.slane %v252, 1
        %v3240 = vsel %vm3232, %v3238, %v3239
        %v3241 = vrot.slane %v253, 1
        %v3242 = vsel %vm3232, %v3239, %v3241
        %v3243 = vrot.slane %v254, 1
        %v3244 = vrot.slane %v255, 1
        %v3245 = vsel %vm3232, %v3243, %v3244
        %v3246 = vrot.slane %v256, 1
        %v3247 = vsel %vm3232, %v3244, %v3246
        %v3248 = vrot.slane %v257, 1
        %v3249 = vrot.slane %v258, 1
        %v3250 = vsel %vm3232, %v3248, %v3249
        %v3251 = vrot.slane %v259, 1
        %v3252 = vsel %vm3232, %v3249, %v3251
        %v3253 = vrot.slane %v260, 1
        %v3254 = vrot.slane %v261, 1
        %v3255 = vsel %vm3232, %v3253, %v3254
        %v3256 = vrot.slane %v262, 1
        %v3257 = vsel %vm3232, %v3254, %v3256
        %v3258 = vrot.slane %v263, 1
        %v3259 = vrot.slane %v264, 1
        %v3260 = vsel %vm3232, %v3258, %v3259
        %v3261 = vrot.slane %v265, 1
        %v3262 = vsel %vm3232, %v3259, %v3261
        %v3263 = vrot.slane %v266, 1
        %v3264 = vrot.slane %v267, 1
        %v3265 = vsel %vm3232, %v3263, %v3264
        %v3266 = vrot.slane %v268, 1
        %v3267 = vsel %vm3232, %v3264, %v3266
        %v3268 = vrot.slane %v269, 1
        %v3269 = vrot.slane %v270, 1
        %v3270 = vsel %vm3232, %v3268, %v3269
        %v3271 = vrot.slane %v271, 1
        %v3272 = vsel %vm3232, %v3269, %v3271
        %v3289 = vld [vmem:[%s4] sm:$0x1]
        %v3291 = vlaneseq
        %v3292 = vshrl.u32 %v3291, 7
        %v3293 = vsub.s32 0, %v3292
        %v3294 = vrot.slane %v3289, %v3293
        %v3296 = vadd.f32 %v3192, %v3294
        %v3297 = vadd.f32 %v3193, %v3294
        %v3298 = vadd.f32 %v3194, %v3294
        %v3299 = vadd.f32 %v3195, %v3294
        %v3300 = vadd.f32 %v3196, %v3294
        %v3301 = vadd.f32 %v3197, %v3294
        %v3302 = vadd.f32 %v3198, %v3294
        %v3303 = vadd.f32 %v3199, %v3294
        %v3304 = vadd.f32 %v3200, %v3294
        %v3305 = vadd.f32 %v3201, %v3294
        %v3306 = vadd.f32 %v3202, %v3294
        %v3307 = vadd.f32 %v3203, %v3294
        %v3308 = vadd.f32 %v3204, %v3294
        %v3309 = vadd.f32 %v3205, %v3294
        %v3310 = vadd.f32 %v3206, %v3294
        %v3311 = vadd.f32 %v3207, %v3294
        %v3312 = vadd.f32 %v3296, %v3235
        %v3313 = vadd.f32 %v3297, %v3237
        %v3314 = vadd.f32 %v3298, %v3240
        %v3315 = vadd.f32 %v3299, %v3242
        %v3316 = vadd.f32 %v3300, %v3245
        %v3317 = vadd.f32 %v3301, %v3247
        %v3318 = vadd.f32 %v3302, %v3250
        %v3319 = vadd.f32 %v3303, %v3252
        %v3320 = vadd.f32 %v3304, %v3255
        %v3321 = vadd.f32 %v3305, %v3257
        %v3322 = vadd.f32 %v3306, %v3260
        %v3323 = vadd.f32 %v3307, %v3262
        %v3324 = vadd.f32 %v3308, %v3265
        %v3325 = vadd.f32 %v3309, %v3267
        %v3326 = vadd.f32 %v3310, %v3270
        %v3327 = vadd.f32 %v3311, %v3272
        %v3328 = vmax.f32 %v3312, 0.0
        %v3329 = vmax.f32 %v3313, 0.0
        %v3330 = vmax.f32 %v3314, 0.0
        %v3331 = vmax.f32 %v3315, 0.0
        %v3332 = vmax.f32 %v3316, 0.0
        %v3333 = vmax.f32 %v3317, 0.0
        %v3334 = vmax.f32 %v3318, 0.0
        %v3335 = vmax.f32 %v3319, 0.0
        %v3336 = vmax.f32 %v3320, 0.0
        %v3337 = vmax.f32 %v3321, 0.0
        %v3338 = vmax.f32 %v3322, 0.0
        %v3339 = vmax.f32 %v3323, 0.0
        %v3340 = vmax.f32 %v3324, 0.0
        %v3341 = vmax.f32 %v3325, 0.0
        %v3342 = vmax.f32 %v3326, 0.0
        %v3343 = vmax.f32 %v3327, 0.0
        %3344 = vst [vmem:[%s231] sm:$0xff] %v3328
        %3345 = vst [vmem:[%s231 + $0x8] sm:$0xff] %v3329
        %3346 = vst [vmem:[%s231 + $0x10] sm:$0xff] %v3330
        %3347 = vst [vmem:[%s231 + $0x18] sm:$0xff] %v3331
        %3348 = vst [vmem:[%s231 + $0x20] sm:$0xff] %v3332
        %3349 = vst [vmem:[%s231 + $0x28] sm:$0xff] %v3333
        %3350 = vst [vmem:[%s231 + $0x30] sm:$0xff] %v3334
        %3351 = vst [vmem:[%s231 + $0x38] sm:$0xff] %v3335
        %3352 = vst [vmem:[%s231 + $0x40] sm:$0xff] %v3336
        %3353 = vst [vmem:[%s231 + $0x48] sm:$0xff] %v3337
        %3354 = vst [vmem:[%s231 + $0x50] sm:$0xff] %v3338
        %3355 = vst [vmem:[%s231 + $0x58] sm:$0xff] %v3339
        %3356 = vst [vmem:[%s231 + $0x60] sm:$0xff] %v3340
        %3357 = vst [vmem:[%s231 + $0x68] sm:$0xff] %v3341
        %3358 = vst [vmem:[%s231 + $0x70] sm:$0xff] %v3342
        %3359 = vst [vmem:[%s231 + $0x78] sm:$0xff] %v3343
        %s3360 = sand.u32 %s151, 1
        %s3361 = scalar_lea.sflag [#allocation3], %s3360
        %s3362 = sand.u32 %s151, 1
        %s3363 = smul.addr %s3362, 128
        %s3364 = scalar_lea.vmem [#allocation2], %s3363
        // Predicated region
        $region41: #{tpu_custom_call.1} parent=39 // pred_check
          %p3365 = pneg %p161
        $region42: #{tpu_custom_call.1} parent=39 // pred_check_branch
          %3367 = sbr.rel (%p3365) target = $region44
        $region43: #{tpu_custom_call.1} parent=39 // pred_region
          %s3368 = smul.u32 8, %s24
          %s3370 = ssub.s32 2048, 2048
          %3371 = vsyncadd %s3361, %s3370
          %s3372 = smul.addr %s3368, 2
          %s3373 = smul.addr %s23, 32
          %s3374 = sadd.s32 %s3372, %s3373
          %s3375 = smul.addr %s3374, 128
          %s3376 = scalar_lea.hbm %s5, %s3375
          %s3377 = sshll.u32 %s3364, 4
          %s3378 = int_to_ptr.vmem [resolvable:$true] %s3377
          %3383 = dma.vmem_to_hbm [thread:$0]  %s3378, 2048, %s3376, %s3361, 128, 128, 8
        $region44: #{tpu_custom_call.1} parent=39 // pred_fallthru
          _
      $region40: #{tpu_custom_call.1} parent=5 // pred_fallthru
        _
      %p3384 = scmp.le.s32.totalorder 2, %s14
      // Predicated region
      $region45: #{tpu_custom_call.1} parent=5 // pred_check
        %p3385 = pneg %p3384
      $region46: #{tpu_custom_call.1} parent=5 // pred_check_branch
        %3387 = sbr.rel (%p3385) target = $region48
      $region47: #{tpu_custom_call.1} parent=5 // pred_region
        %s3388 = ssub.s32 %s14, 2
        // Predicated region
        $region49: #{tpu_custom_call.1} parent=47 // pred_check
          %p3389 = pneg %p167
        $region50: #{tpu_custom_call.1} parent=47 // pred_check_branch
          %3391 = sbr.rel (%p3389) target = $region52
        $region51: #{tpu_custom_call.1} parent=47 // pred_region
          %s3392 = sand.u32 %s152, 1
          %s3393 = scalar_lea.sflag [#allocation3], %s3392
          %s3394 = sand.u32 %s152, 1
          %s3395 = smul.addr %s3394, 128
          %s3396 = scalar_lea.vmem [#allocation2], %s3395
          %3397 = dma.done %s3393, 2048
        $region52: #{tpu_custom_call.1} parent=47 // pred_fallthru
          _
      $region48: #{tpu_custom_call.1} parent=5 // pred_fallthru
        _
    $region6: #{tpu_custom_call.1} parent=1 // loop_footer
      %s18 = sadd.s32 1, %s14
    $region7: #{tpu_custom_call.1} parent=1 // loop_footer_branch
      %13 = sbr.rel target = $region3
    $region8: #{tpu_custom_call.1} parent=1 // loop_exit
      _
    %3398 = vsyncpa [#allocation3], 1
    %s3399 = scalar_lea.sflag [#allocation3], 1
    %3400 = vsyncpa %s3399, 1

</llo_original>
